<compile_context>
chip_gen: v5e
topology: v5e:2x2
jax: 0.10.0
libtpu: 0.0.40
codegen_flags: <defaults>
</compile_context>

<pallas_src>
import math

import jax
import jax.numpy as jnp
from jax import lax
from jax.experimental import pallas as pl
from jax.experimental.pallas import tpu as pltpu


def _gelu_exact(x):
    # Matches torch.nn.GELU() default (erf-based, non-approximate).
    return 0.5 * x * (1.0 + lax.erf(x * jnp.float32(1.0 / math.sqrt(2.0))))


def _match_mlp_kernel(vis_ref, txt_ref, w1v_ref, w1t_ref, b1_ref,
                      w2_ref, b2_ref, w3_ref, b3_ref, o_ref):
    tb = vis_ref.shape[0]
    T = txt_ref.shape[0]
    H1p = w1v_ref.shape[1]
    H2p = w2_ref.shape[1]

    # Split layer 1: per-tile visual projection + full-T text projection.
    # (The text / weight block indices are constant, so their tiles stay
    # resident in VMEM across grid steps - no re-DMA.)
    v_proj = jnp.dot(vis_ref[...], w1v_ref[...],
                     preferred_element_type=jnp.float32)                    # (tb, H1p)
    t_proj = jnp.dot(txt_ref[...], w1t_ref[...],
                     preferred_element_type=jnp.float32) + b1_ref[...]      # (T, H1p)

    # Pairwise hidden activations via broadcast-add (concat never built).
    h1 = _gelu_exact(v_proj[:, None, :] + t_proj[None, :, :])               # (tb, T, H1p)
    h1 = h1.reshape(tb * T, H1p)     # lane dim unchanged; T % 8 == 0 -> free reshape

    h2 = _gelu_exact(
        jnp.dot(h1, w2_ref[...], preferred_element_type=jnp.float32)
        + b2_ref[...])                                                      # (tb*T, H2p)
    h2 = h2.reshape(tb, T, H2p)

    # Layer 3 has N=1: VPU multiply + lane reduction instead of an MXU matmul;
    # result is the lane-dense (tb, T) output block.
    out = jnp.sum(h2 * w3_ref[...], axis=-1) + b3_ref[...]                  # (tb, T)
    o_ref[...] = out.astype(o_ref.dtype)


def _round_up(n, m):
    return ((n + m - 1) // m) * m


def _pad2d(a, rows, cols):
    return jnp.pad(a, ((0, rows - a.shape[0]), (0, cols - a.shape[1])))


def match_predictor_forward(visual, text, params, *, tb=None):
    """visual: (B, Ev) f32, text: (T, Et) f32 -> squeeze of (B, T) f32."""
    B, Ev = visual.shape
    T, Et = text.shape

    w1, b1, w2, b2, w3, b3 = (params["w1"], params["b1"], params["w2"],
                              params["b2"], params["w3"], params["b3"])
    H1 = w1.shape[1]
    H2 = w2.shape[1]

    # Zero-pad hidden dims to lane multiples (128) for MXU alignment.
    # gelu(0) == 0 and the padded w3 entries are 0, so results are unchanged.
    H1p = _round_up(H1, 128)
    H2p = _round_up(H2, 128)

    w1v = _pad2d(w1[:Ev, :], Ev, H1p)          # visual half of W1
    w1t = _pad2d(w1[Ev:, :], Et, H1p)          # text half of W1
    b1p = _pad2d(b1, 1, H1p)
    w2p = _pad2d(w2, H1p, H2p)
    b2p = _pad2d(b2, 1, H2p)
    w3r = _pad2d(w3.reshape(1, H2), 1, H2p)    # (1, H2p) row for the VPU reduce
    b3p = b3.reshape(1, 1)

    # TODO(synk): nn.Dropout(p=0.5) is identity in eval mode; training-mode RNG
    # masking (pltpu.prng_*) is not implemented here.
    # TODO(synk): for v6e/v7x, casting activations/weights to bf16 (f32 accum)
    # would ~2x MXU rate; kept f32 here for exact parity with the torch module.

    # B-tile size: keep >= 2 grid steps when possible (v7x megacore sharding),
    # and a sublane-aligned tile. For large T, one would additionally tile T.
    if tb is None:
        tb = B
        for cand in (1024, 512, 256, 128, 64, 32, 16, 8):
            if B % cand == 0 and B // cand >= 2:
                tb = cand
                break
    assert B % tb == 0, "B must tile evenly (pad B or choose another tb)"
    grid = (B // tb,)

    out = pl.pallas_call(
        _match_mlp_kernel,
        out_shape=jax.ShapeDtypeStruct((B, T), jnp.float32),
        grid_spec=pltpu.PrefetchScalarGridSpec(
            num_scalar_prefetch=0,
            grid=grid,
            in_specs=[
                pl.BlockSpec((tb, Ev), lambda i: (i, 0)),     # visual rows tile
                pl.BlockSpec((T, Et), lambda i: (0, 0)),      # text (resident)
                pl.BlockSpec((Ev, H1p), lambda i: (0, 0)),    # W1 visual half
                pl.BlockSpec((Et, H1p), lambda i: (0, 0)),    # W1 text half
                pl.BlockSpec((1, H1p), lambda i: (0, 0)),     # b1
                pl.BlockSpec((H1p, H2p), lambda i: (0, 0)),   # W2
                pl.BlockSpec((1, H2p), lambda i: (0, 0)),     # b2
                pl.BlockSpec((1, H2p), lambda i: (0, 0)),     # w3 row
                pl.BlockSpec((1, 1), lambda i: (0, 0)),       # b3
            ],
            out_specs=pl.BlockSpec((tb, T), lambda i: (i, 0)),
        ),
        compiler_params=pltpu.CompilerParams(
            dimension_semantics=("parallel",),
        ),
    )(visual, text, w1v, w1t, b1p, w2p, b2p, w3r, b3p)

    # torch .squeeze() also drops size-1 B / T dims.
    return jnp.squeeze(out)


def init_params(key, emb_dim_visual, emb_dim_text, hidden_dims):
    """Deterministic init matching MLP(emb_v+emb_t, hidden_dims, 1) layer shapes."""
    din = emb_dim_visual + emb_dim_text
    dims = [din] + list(hidden_dims) + [1]
    keys = jax.random.split(key, 2 * (len(dims) - 1))
    params = {}
    for idx, (d_in, d_out) in enumerate(zip(dims[:-1], dims[1:])):
        bound = 1.0 / math.sqrt(d_in)
        w = jax.random.uniform(keys[2 * idx], (d_in, d_out),
                               minval=-bound, maxval=bound, dtype=jnp.float32)
        b = jax.random.uniform(keys[2 * idx + 1], (1, d_out),
                               minval=-bound, maxval=bound, dtype=jnp.float32)
        params[f"w{idx + 1}"] = w
        params[f"b{idx + 1}"] = b
    return params


def reference_forward(visual, text, params):
    B, Ev = visual.shape
    T, Et = text.shape
    vis_rep = jnp.broadcast_to(visual[:, None, :], (B, T, Ev))
    txt_rep = jnp.broadcast_to(text[None, :, :], (B, T, Et))
    x = jnp.concatenate([vis_rep, txt_rep], axis=-1)
    h = _gelu_exact(x @ params["w1"] + params["b1"])
    h = _gelu_exact(h @ params["w2"] + params["b2"])
    o = h @ params["w3"] + params["b3"]
    return jnp.squeeze(o[..., 0])


if __name__ == "__main__":
    # Small shapes consistent with the forward pass (B*T pair matrix, MLP head).
    B, T = 16, 16
    emb_dim_visual, emb_dim_text = 32, 32
    hidden_dims = (64, 32)

    key = jax.random.PRNGKey(0)
    k_v, k_t, k_p = jax.random.split(key, 3)
    visual = jax.random.normal(k_v, (B, emb_dim_visual), dtype=jnp.float32)
    text = jax.random.normal(k_t, (T, emb_dim_text), dtype=jnp.float32)
    params = init_params(k_p, emb_dim_visual, emb_dim_text, hidden_dims)

    out = match_predictor_forward(visual, text, params)
    out = jax.block_until_ready(out)

    ref = reference_forward(visual, text, params)
    assert out.shape == (B, T), out.shape
    max_err = float(jnp.max(jnp.abs(out - ref)))
    assert jnp.allclose(out, ref, atol=1e-4, rtol=1e-4), max_err
    print("KERNEL_OK")
</pallas_src>

<mosaic_0001>
module attributes {stable_mosaic.version = 11 : i64} {
  func.func @_match_mlp_kernel(%arg0: i32, %arg1: memref<8x32xf32, #tpu.memory_space<vmem>>, %arg2: memref<16x32xf32, #tpu.memory_space<vmem>>, %arg3: memref<32x128xf32, #tpu.memory_space<vmem>>, %arg4: memref<32x128xf32, #tpu.memory_space<vmem>>, %arg5: memref<1x128xf32, #tpu.memory_space<vmem>>, %arg6: memref<128x128xf32, #tpu.memory_space<vmem>>, %arg7: memref<1x128xf32, #tpu.memory_space<vmem>>, %arg8: memref<1x128xf32, #tpu.memory_space<vmem>>, %arg9: memref<1x1xf32, #tpu.memory_space<vmem>>, %arg10: memref<8x16xf32, #tpu.memory_space<vmem>>) attributes {dimension_semantics = [#tpu.dimension_semantics<parallel>], iteration_bounds = array<i64: 2>, scalar_prefetch = 0 : i64, scratch_operands = 0 : i64, tpu.core_type = #tpu.core_type<tc>, window_params = [{transform_indices = @transform_0, window_bounds = array<i64: 8, 32>}, {pipeline_mode = #tpu.pipeline_mode<synchronous>, transform_indices = @transform_1, window_bounds = array<i64: 16, 32>}, {pipeline_mode = #tpu.pipeline_mode<synchronous>, transform_indices = @transform_2, window_bounds = array<i64: 32, 128>}, {pipeline_mode = #tpu.pipeline_mode<synchronous>, transform_indices = @transform_3, window_bounds = array<i64: 32, 128>}, {pipeline_mode = #tpu.pipeline_mode<synchronous>, transform_indices = @transform_4, window_bounds = array<i64: 1, 128>}, {pipeline_mode = #tpu.pipeline_mode<synchronous>, transform_indices = @transform_5, window_bounds = array<i64: 128, 128>}, {pipeline_mode = #tpu.pipeline_mode<synchronous>, transform_indices = @transform_6, window_bounds = array<i64: 1, 128>}, {pipeline_mode = #tpu.pipeline_mode<synchronous>, transform_indices = @transform_7, window_bounds = array<i64: 1, 128>}, {pipeline_mode = #tpu.pipeline_mode<synchronous>, transform_indices = @transform_8, window_bounds = array<i64: 1, 1>}, {transform_indices = @transform_9, window_bounds = array<i64: 8, 16>}]} {
    %c0 = arith.constant 0 : index
    %c0_0 = arith.constant 0 : index
    %0 = vector.load %arg1[%c0, %c0_0] : memref<8x32xf32, #tpu.memory_space<vmem>>, vector<8x32xf32>
    %c0_1 = arith.constant 0 : index
    %c0_2 = arith.constant 0 : index
    %1 = vector.load %arg3[%c0_1, %c0_2] : memref<32x128xf32, #tpu.memory_space<vmem>>, vector<32x128xf32>
    %cst = arith.constant dense<0.000000e+00> : vector<8x128xf32>
    %2 = tpu.matmul %0, %1, %cst {dimension_numbers = #tpu.dot_dimension_numbers<[1], [0], [0], [1], [0, 0, 1, 1], [], []>} : vector<8x32xf32>, vector<32x128xf32>, vector<8x128xf32> -> vector<8x128xf32>
    %c0_3 = arith.constant 0 : index
    %c0_4 = arith.constant 0 : index
    %3 = vector.load %arg2[%c0_3, %c0_4] : memref<16x32xf32, #tpu.memory_space<vmem>>, vector<16x32xf32>
    %c0_5 = arith.constant 0 : index
    %c0_6 = arith.constant 0 : index
    %4 = vector.load %arg4[%c0_5, %c0_6] : memref<32x128xf32, #tpu.memory_space<vmem>>, vector<32x128xf32>
    %cst_7 = arith.constant dense<0.000000e+00> : vector<16x128xf32>
    %5 = tpu.matmul %3, %4, %cst_7 {dimension_numbers = #tpu.dot_dimension_numbers<[1], [0], [0], [1], [0, 0, 1, 1], [], []>} : vector<16x32xf32>, vector<32x128xf32>, vector<16x128xf32> -> vector<16x128xf32>
    %c0_8 = arith.constant 0 : index
    %c0_9 = arith.constant 0 : index
    %6 = vector.load %arg5[%c0_8, %c0_9] : memref<1x128xf32, #tpu.memory_space<vmem>>, vector<1x128xf32>
    %7 = vector.broadcast %6 : vector<1x128xf32> to vector<16x128xf32>
    %8 = arith.addf %5, %7 : vector<16x128xf32>
    %9 = vector.shape_cast %2 : vector<8x128xf32> to vector<8x1x128xf32>
    %10 = vector.shape_cast %8 : vector<16x128xf32> to vector<1x16x128xf32>
    %11 = vector.broadcast %9 : vector<8x1x128xf32> to vector<8x16x128xf32>
    %12 = vector.broadcast %10 : vector<1x16x128xf32> to vector<8x16x128xf32>
    %13 = arith.addf %11, %12 : vector<8x16x128xf32>
    %cst_10 = arith.constant 5.000000e-01 : f32
    %14 = vector.broadcast %cst_10 : f32 to vector<8x16x128xf32>
    %15 = arith.mulf %14, %13 : vector<8x16x128xf32>
    %cst_11 = arith.constant 0.707106769 : f32
    %16 = vector.broadcast %cst_11 : f32 to vector<8x16x128xf32>
    %17 = arith.mulf %13, %16 : vector<8x16x128xf32>
    %18 = math.erf %17 : vector<8x16x128xf32>
    %cst_12 = arith.constant 1.000000e+00 : f32
    %19 = vector.broadcast %cst_12 : f32 to vector<8x16x128xf32>
    %20 = arith.addf %19, %18 : vector<8x16x128xf32>
    %21 = arith.mulf %15, %20 : vector<8x16x128xf32>
    %22 = vector.shape_cast %21 : vector<8x16x128xf32> to vector<128x128xf32>
    %c0_13 = arith.constant 0 : index
    %c0_14 = arith.constant 0 : index
    %23 = vector.load %arg6[%c0_13, %c0_14] : memref<128x128xf32, #tpu.memory_space<vmem>>, vector<128x128xf32>
    %cst_15 = arith.constant dense<0.000000e+00> : vector<128x128xf32>
    %24 = tpu.matmul %22, %23, %cst_15 {dimension_numbers = #tpu.dot_dimension_numbers<[1], [0], [0], [1], [0, 0, 1, 1], [], []>} : vector<128x128xf32>, vector<128x128xf32>, vector<128x128xf32> -> vector<128x128xf32>
    %c0_16 = arith.constant 0 : index
    %c0_17 = arith.constant 0 : index
    %25 = vector.load %arg7[%c0_16, %c0_17] : memref<1x128xf32, #tpu.memory_space<vmem>>, vector<1x128xf32>
    %26 = vector.broadcast %25 : vector<1x128xf32> to vector<128x128xf32>
    %27 = arith.addf %24, %26 : vector<128x128xf32>
    %cst_18 = arith.constant 5.000000e-01 : f32
    %28 = vector.broadcast %cst_18 : f32 to vector<128x128xf32>
    %29 = arith.mulf %28, %27 : vector<128x128xf32>
    %cst_19 = arith.constant 0.707106769 : f32
    %30 = vector.broadcast %cst_19 : f32 to vector<128x128xf32>
    %31 = arith.mulf %27, %30 : vector<128x128xf32>
    %32 = math.erf %31 : vector<128x128xf32>
    %cst_20 = arith.constant 1.000000e+00 : f32
    %33 = vector.broadcast %cst_20 : f32 to vector<128x128xf32>
    %34 = arith.addf %33, %32 : vector<128x128xf32>
    %35 = arith.mulf %29, %34 : vector<128x128xf32>
    %36 = vector.shape_cast %35 : vector<128x128xf32> to vector<8x16x128xf32>
    %c0_21 = arith.constant 0 : index
    %c0_22 = arith.constant 0 : index
    %37 = vector.load %arg8[%c0_21, %c0_22] : memref<1x128xf32, #tpu.memory_space<vmem>>, vector<1x128xf32>
    %38 = vector.shape_cast %37 : vector<1x128xf32> to vector<1x1x128xf32>
    %39 = vector.broadcast %38 : vector<1x1x128xf32> to vector<8x16x128xf32>
    %40 = arith.mulf %36, %39 : vector<8x16x128xf32>
    %cst_23 = arith.constant dense<0.000000e+00> : vector<8x16xf32>
    %41 = vector.multi_reduction <add>, %40, %cst_23 [2] : vector<8x16x128xf32> to vector<8x16xf32>
    %c0_24 = arith.constant 0 : index
    %c0_25 = arith.constant 0 : index
    %42 = vector.load %arg9[%c0_24, %c0_25] : memref<1x1xf32, #tpu.memory_space<vmem>>, vector<1x1xf32>
    %43 = vector.broadcast %42 : vector<1x1xf32> to vector<8x16xf32>
    %44 = arith.addf %41, %43 : vector<8x16xf32>
    %c0_26 = arith.constant 0 : index
    %c0_27 = arith.constant 0 : index
    %45 = vector.load %arg10[%c0_26, %c0_27] : memref<8x16xf32, #tpu.memory_space<vmem>>, vector<8x16xf32>
    tpu.vector_store %arg10[%c0_26, %c0_27], %44 {strides = array<i32>} : memref<8x16xf32, #tpu.memory_space<vmem>>, vector<8x16xf32>,
    return
  }
  func.func @transform_0(%arg0: i32) -> (i32, i32) {
    %c0_i32 = arith.constant 0 : i32
    %c0_i32_0 = arith.constant 0 : i32
    return %arg0, %c0_i32 : i32, i32
  }
  func.func @transform_1(%arg0: i32) -> (i32, i32) {
    %c0_i32 = arith.constant 0 : i32
    %c0_i32_0 = arith.constant 0 : i32
    %c0_i32_1 = arith.constant 0 : i32
    return %c0_i32, %c0_i32_0 : i32, i32
  }
  func.func @transform_2(%arg0: i32) -> (i32, i32) {
    %c0_i32 = arith.constant 0 : i32
    %c0_i32_0 = arith.constant 0 : i32
    %c0_i32_1 = arith.constant 0 : i32
    return %c0_i32, %c0_i32_0 : i32, i32
  }
  func.func @transform_3(%arg0: i32) -> (i32, i32) {
    %c0_i32 = arith.constant 0 : i32
    %c0_i32_0 = arith.constant 0 : i32
    %c0_i32_1 = arith.constant 0 : i32
    return %c0_i32, %c0_i32_0 : i32, i32
  }
  func.func @transform_4(%arg0: i32) -> (i32, i32) {
    %c0_i32 = arith.constant 0 : i32
    %c0_i32_0 = arith.constant 0 : i32
    %c0_i32_1 = arith.constant 0 : i32
    return %c0_i32, %c0_i32_0 : i32, i32
  }
  func.func @transform_5(%arg0: i32) -> (i32, i32) {
    %c0_i32 = arith.constant 0 : i32
    %c0_i32_0 = arith.constant 0 : i32
    %c0_i32_1 = arith.constant 0 : i32
    return %c0_i32, %c0_i32_0 : i32, i32
  }
  func.func @transform_6(%arg0: i32) -> (i32, i32) {
    %c0_i32 = arith.constant 0 : i32
    %c0_i32_0 = arith.constant 0 : i32
    %c0_i32_1 = arith.constant 0 : i32
    return %c0_i32, %c0_i32_0 : i32, i32
  }
  func.func @transform_7(%arg0: i32) -> (i32, i32) {
    %c0_i32 = arith.constant 0 : i32
    %c0_i32_0 = arith.constant 0 : i32
    %c0_i32_1 = arith.constant 0 : i32
    return %c0_i32, %c0_i32_0 : i32, i32
  }
  func.func @transform_8(%arg0: i32) -> (i32, i32) {
    %c0_i32 = arith.constant 0 : i32
    %c0_i32_0 = arith.constant 0 : i32
    %c0_i32_1 = arith.constant 0 : i32
    return %c0_i32, %c0_i32_0 : i32, i32
  }
  func.func @transform_9(%arg0: i32) -> (i32, i32) {
    %c0_i32 = arith.constant 0 : i32
    %c0_i32_0 = arith.constant 0 : i32
    return %arg0, %c0_i32 : i32, i32
  }
}

</mosaic_0001>

<llo_original>
// kernel: tpu_custom_call.1
$region0: #{tpu_custom_call.1}
  #allocation0 [shape = 'u32[]', space=smem, size = 0x4, offset = 0x4, fixed_abs, tag = 'smem constant byte address 0x4 - core index']
  #allocation1 [shape = 'u32[72,128]{1,0:T(1,128)}', space=vmem, size = 0x9000, scoped, tag = 'internal scratch']
  #allocation2 [shape = 'f32[1,1]{1,0:T(1,128)S(1)}', space=vmem, size = 0x200, scoped, tag = 'scoped memory for tpu_custom_call.1']
  %s0 = inlined_call_operand.hbm [shape: f32[16,32], index: 0, kind: input, shape index: {}]
  %s1 = inlined_call_operand.hbm [shape: f32[16,32], index: 1, kind: input, shape index: {}]
  %s2 = inlined_call_operand.hbm [shape: f32[32,128], index: 2, kind: input, shape index: {}]
  %s3 = inlined_call_operand.hbm [shape: f32[32,128], index: 3, kind: input, shape index: {}]
  %s4 = inlined_call_operand.vmem [shape: f32[1,128], index: 4, kind: input, shape index: {}]
  %s5 = inlined_call_operand.hbm [shape: f32[128,128], index: 5, kind: input, shape index: {}]
  %s6 = inlined_call_operand.vmem [shape: f32[1,128], index: 6, kind: input, shape index: {}]
  %s7 = inlined_call_operand.vmem [shape: f32[1,128], index: 7, kind: input, shape index: {}]
  %s8 = inlined_call_operand.<no memory space> [shape: f32[1,1], index: 8, kind: input, shape index: {}]
  %s9 = inlined_call_operand.hbm [shape: f32[16,16], index: 9, kind: output, shape index: {}]
  %s10 = sld [smem:[#allocation0]]
  $region89: #{tpu_custom_call.1} parent=0
    _
  %s12 = ssub.s32 1, %s10
  %s13 = scalar_select 0, %s12, %s10
  %v14 = vstv %s8
  %15 = vst [vmem:[#allocation2] sm:$0x1] %v14
  $region1: #{tpu_custom_call.1} parent=0
    #allocation3 [shape = 'u8[8192]{0}', space=vmem, size = 0x2000, scoped, tag = 'input window, operand 0']
    #allocation4 [shape = 's32[2]{0}', space=sflag, size = 0x8, scoped, tag = 'scoped memory for tpu_custom_call.1']
    #allocation5 [shape = 's32[2]{0}', space=sflag, size = 0x8, scoped, tag = 'scoped memory for tpu_custom_call.1']
    #allocation6 [shape = 'u8[8192]{0}', space=vmem, size = 0x2000, scoped, tag = 'input window, operand 1, single buffered']
    #allocation7 [shape = 's32[1]{0}', space=sflag, size = 0x4, scoped, tag = 'scoped memory for tpu_custom_call.1']
    #allocation8 [shape = 'u8[16384]{0}', space=vmem, size = 0x4000, scoped, tag = 'input window, operand 2, single buffered']
    #allocation9 [shape = 'u8[16384]{0}', space=vmem, size = 0x4000, scoped, tag = 'input window, operand 3, single buffered']
    #allocation10 [shape = 's32[1]{0}', space=sflag, size = 0x4, scoped, tag = 'scoped memory for tpu_custom_call.1']
    #allocation11 [shape = 'u8[65536]{0}', space=vmem, size = 0x10000, scoped, tag = 'input window, operand 5, single buffered']
    #allocation12 [shape = 'u8[8192]{0}', space=vmem, size = 0x2000, scoped, tag = 'output window, operand 0']
    %16 = vsyncpa [#allocation4], 0
    %s17 = scalar_lea.sflag [#allocation4], 1
    %18 = vsyncpa %s17, 0
    %19 = vsyncpa [#allocation7], 0
    %20 = vsyncpa [#allocation10], 0
    %21 = vsyncpa [#allocation5], 0
    %s22 = scalar_lea.sflag [#allocation5], 1
    %23 = vsyncpa %s22, 0
    loop: start=0, step=1, limit=4
    $region2: #{tpu_custom_call.1} parent=1 // loop_pre_header
      _
    $region3: #{tpu_custom_call.1} parent=1 // loop_header
      %s25 = sphi 0, %s29
      %p26 = scmp.ge.s32.totalorder %s25, 4
      %s35 = sphi 0, %s37
      %s38 = sphi 0, %s35
      %s39 = sphi 0, %s38
      %s55 = sphi 0, %s39
      %s59 = sphi 0, %s59
      %s61 = sphi 0, %s59
      %s62 = sphi 0, %s61
      %s76 = sphi 0, %s62
      %s80 = sphi 0, %s80
      %s82 = sphi 0, %s80
      %s83 = sphi 0, %s82
      %s97 = sphi 0, %s83
      %s101 = sphi 0, %s101
      %s103 = sphi 0, %s101
      %s104 = sphi 0, %s103
      %s118 = sphi 0, %s104
      %s122 = sphi 0, %s122
      %s124 = sphi 0, %s122
      %s125 = sphi 0, %s124
      %s139 = sphi 0, %s125
      %s143 = sphi 0, %s143
      %s145 = sphi 0, %s143
      %s146 = sphi 0, %s145
      %s160 = sphi 0, %s146
      %s164 = sphi 0, %s164
      %s166 = sphi 0, %s164
      %s167 = sphi 0, %s166
      %s181 = sphi 0, %s167
      %s185 = sphi 0, %s185
      %s187 = sphi 0, %s185
      %s188 = sphi 0, %s187
      %s202 = sphi 0, %s188
      %s206 = sphi 0, %s206
      %s208 = sphi 0, %s206
      %s209 = sphi 0, %s208
      %s223 = sphi 0, %s209
      %s229 = sphi 0, %s231
      %s232 = sphi 0, %s229
      %s233 = sphi 0, %s232
      %s249 = sphi 0, %s233
    $region4: #{tpu_custom_call.1} parent=1 // loop_header_branch
      %28 = sbr.rel (%p26) target = $region8
    $region5: #{tpu_custom_call.1} parent=1 // loop_body
      %s30 = ssub.s32 %s25, 1
      %s31 = ssub.s32 %s25, 2
      %s32 = sadd.s32 %s25, 1
      %s33 = ssub.s32 %s25, %s32
      %p34 = scmp.eq.s32.totalorder %s33, 0
      %s36 = sadd.s32 %s35, 1
      %s37 = scalar_select %p34, %s35, %s36
      %p40 = pneg %p34
      %p41 = scmp.eq.s32.totalorder %s25, 1
      %p42 = por %p40, %p41
      %p43 = scmp.ne.s32.totalorder %s35, %s38
      %p44 = scmp.eq.s32.totalorder %s25, 0
      %p45 = por %p43, %p44
      %p46 = scmp.ne.s32.totalorder %s35, %s38
      %p47 = scmp.eq.s32.totalorder %s30, 1
      %p48 = por %p46, %p47
      %p49 = scmp.ne.s32.totalorder %s38, %s39
      %p50 = scmp.eq.s32.totalorder %s30, 0
      %p51 = por %p49, %p50
      %p52 = scmp.ne.s32.totalorder %s38, %s39
      %p53 = scmp.eq.s32.totalorder %s31, 1
      %p54 = por %p52, %p53
      %p56 = scmp.ne.s32.totalorder %s39, %s55
      %p57 = scmp.eq.s32.totalorder %s31, 0
      %p58 = por %p56, %p57
      %s60 = sadd.s32 %s59, 1
      %p63 = scmp.eq.s32.totalorder %s25, 1
      %p64 = scmp.ne.s32.totalorder %s59, %s61
      %p65 = scmp.eq.s32.totalorder %s25, 0
      %p66 = por %p64, %p65
      %p67 = scmp.ne.s32.totalorder %s59, %s61
      %p68 = scmp.eq.s32.totalorder %s30, 1
      %p69 = por %p67, %p68
      %p70 = scmp.ne.s32.totalorder %s61, %s62
      %p71 = scmp.eq.s32.totalorder %s30, 0
      %p72 = por %p70, %p71
      %p73 = scmp.ne.s32.totalorder %s61, %s62
      %p74 = scmp.eq.s32.totalorder %s31, 1
      %p75 = por %p73, %p74
      %p77 = scmp.ne.s32.totalorder %s62, %s76
      %p78 = scmp.eq.s32.totalorder %s31, 0
      %p79 = por %p77, %p78
      %s81 = sadd.s32 %s80, 1
      %p84 = scmp.eq.s32.totalorder %s25, 1
      %p85 = scmp.ne.s32.totalorder %s80, %s82
      %p86 = scmp.eq.s32.totalorder %s25, 0
      %p87 = por %p85, %p86
      %p88 = scmp.ne.s32.totalorder %s80, %s82
      %p89 = scmp.eq.s32.totalorder %s30, 1
      %p90 = por %p88, %p89
      %p91 = scmp.ne.s32.totalorder %s82, %s83
      %p92 = scmp.eq.s32.totalorder %s30, 0
      %p93 = por %p91, %p92
      %p94 = scmp.ne.s32.totalorder %s82, %s83
      %p95 = scmp.eq.s32.totalorder %s31, 1
      %p96 = por %p94, %p95
      %p98 = scmp.ne.s32.totalorder %s83, %s97
      %p99 = scmp.eq.s32.totalorder %s31, 0
      %p100 = por %p98, %p99
      %s102 = sadd.s32 %s101, 1
      %p105 = scmp.eq.s32.totalorder %s25, 1
      %p106 = scmp.ne.s32.totalorder %s101, %s103
      %p107 = scmp.eq.s32.totalorder %s25, 0
      %p108 = por %p106, %p107
      %p109 = scmp.ne.s32.totalorder %s101, %s103
      %p110 = scmp.eq.s32.totalorder %s30, 1
      %p111 = por %p109, %p110
      %p112 = scmp.ne.s32.totalorder %s103, %s104
      %p113 = scmp.eq.s32.totalorder %s30, 0
      %p114 = por %p112, %p113
      %p115 = scmp.ne.s32.totalorder %s103, %s104
      %p116 = scmp.eq.s32.totalorder %s31, 1
      %p117 = por %p115, %p116
      %p119 = scmp.ne.s32.totalorder %s104, %s118
      %p120 = scmp.eq.s32.totalorder %s31, 0
      %p121 = por %p119, %p120
      %s123 = sadd.s32 %s122, 1
      %p126 = scmp.eq.s32.totalorder %s25, 1
      %p127 = scmp.ne.s32.totalorder %s122, %s124
      %p128 = scmp.eq.s32.totalorder %s25, 0
      %p129 = por %p127, %p128
      %p130 = scmp.ne.s32.totalorder %s122, %s124
      %p131 = scmp.eq.s32.totalorder %s30, 1
      %p132 = por %p130, %p131
      %p133 = scmp.ne.s32.totalorder %s124, %s125
      %p134 = scmp.eq.s32.totalorder %s30, 0
      %p135 = por %p133, %p134
      %p136 = scmp.ne.s32.totalorder %s124, %s125
      %p137 = scmp.eq.s32.totalorder %s31, 1
      %p138 = por %p136, %p137
      %p140 = scmp.ne.s32.totalorder %s125, %s139
      %p141 = scmp.eq.s32.totalorder %s31, 0
      %p142 = por %p140, %p141
      %s144 = sadd.s32 %s143, 1
      %p147 = scmp.eq.s32.totalorder %s25, 1
      %p148 = scmp.ne.s32.totalorder %s143, %s145
      %p149 = scmp.eq.s32.totalorder %s25, 0
      %p150 = por %p148, %p149
      %p151 = scmp.ne.s32.totalorder %s143, %s145
      %p152 = scmp.eq.s32.totalorder %s30, 1
      %p153 = por %p151, %p152
      %p154 = scmp.ne.s32.totalorder %s145, %s146
      %p155 = scmp.eq.s32.totalorder %s30, 0
      %p156 = por %p154, %p155
      %p157 = scmp.ne.s32.totalorder %s145, %s146
      %p158 = scmp.eq.s32.totalorder %s31, 1
      %p159 = por %p157, %p158
      %p161 = scmp.ne.s32.totalorder %s146, %s160
      %p162 = scmp.eq.s32.totalorder %s31, 0
      %p163 = por %p161, %p162
      %s165 = sadd.s32 %s164, 1
      %p168 = scmp.eq.s32.totalorder %s25, 1
      %p169 = scmp.ne.s32.totalorder %s164, %s166
      %p170 = scmp.eq.s32.totalorder %s25, 0
      %p171 = por %p169, %p170
      %p172 = scmp.ne.s32.totalorder %s164, %s166
      %p173 = scmp.eq.s32.totalorder %s30, 1
      %p174 = por %p172, %p173
      %p175 = scmp.ne.s32.totalorder %s166, %s167
      %p176 = scmp.eq.s32.totalorder %s30, 0
      %p177 = por %p175, %p176
      %p178 = scmp.ne.s32.totalorder %s166, %s167
      %p179 = scmp.eq.s32.totalorder %s31, 1
      %p180 = por %p178, %p179
      %p182 = scmp.ne.s32.totalorder %s167, %s181
      %p183 = scmp.eq.s32.totalorder %s31, 0
      %p184 = por %p182, %p183
      %s186 = sadd.s32 %s185, 1
      %p189 = scmp.eq.s32.totalorder %s25, 1
      %p190 = scmp.ne.s32.totalorder %s185, %s187
      %p191 = scmp.eq.s32.totalorder %s25, 0
      %p192 = por %p190, %p191
      %p193 = scmp.ne.s32.totalorder %s185, %s187
      %p194 = scmp.eq.s32.totalorder %s30, 1
      %p195 = por %p193, %p194
      %p196 = scmp.ne.s32.totalorder %s187, %s188
      %p197 = scmp.eq.s32.totalorder %s30, 0
      %p198 = por %p196, %p197
      %p199 = scmp.ne.s32.totalorder %s187, %s188
      %p200 = scmp.eq.s32.totalorder %s31, 1
      %p201 = por %p199, %p200
      %p203 = scmp.ne.s32.totalorder %s188, %s202
      %p204 = scmp.eq.s32.totalorder %s31, 0
      %p205 = por %p203, %p204
      %s207 = sadd.s32 %s206, 1
      %p210 = scmp.eq.s32.totalorder %s25, 1
      %p211 = scmp.ne.s32.totalorder %s206, %s208
      %p212 = scmp.eq.s32.totalorder %s25, 0
      %p213 = por %p211, %p212
      %p214 = scmp.ne.s32.totalorder %s206, %s208
      %p215 = scmp.eq.s32.totalorder %s30, 1
      %p216 = por %p214, %p215
      %p217 = scmp.ne.s32.totalorder %s208, %s209
      %p218 = scmp.eq.s32.totalorder %s30, 0
      %p219 = por %p217, %p218
      %p220 = scmp.ne.s32.totalorder %s208, %s209
      %p221 = scmp.eq.s32.totalorder %s31, 1
      %p222 = por %p220, %p221
      %p224 = scmp.ne.s32.totalorder %s209, %s223
      %p225 = scmp.eq.s32.totalorder %s31, 0
      %p226 = por %p224, %p225
      %s227 = ssub.s32 %s25, %s32
      %p228 = scmp.eq.s32.totalorder %s227, 0
      %s230 = sadd.s32 %s229, 1
      %s231 = scalar_select %p228, %s229, %s230
      %p234 = pneg %p228
      %p235 = scmp.eq.s32.totalorder %s25, 1
      %p236 = por %p234, %p235
      %p237 = scmp.ne.s32.totalorder %s229, %s232
      %p238 = scmp.eq.s32.totalorder %s25, 0
      %p239 = por %p237, %p238
      %p240 = scmp.ne.s32.totalorder %s229, %s232
      %p241 = scmp.eq.s32.totalorder %s30, 1
      %p242 = por %p240, %p241
      %p243 = scmp.ne.s32.totalorder %s232, %s233
      %p244 = scmp.eq.s32.totalorder %s30, 0
      %p245 = por %p243, %p244
      %p246 = scmp.ne.s32.totalorder %s232, %s233
      %p247 = scmp.eq.s32.totalorder %s31, 1
      %p248 = por %p246, %p247
      %p250 = scmp.ne.s32.totalorder %s233, %s249
      %p251 = scmp.eq.s32.totalorder %s31, 0
      %p252 = por %p250, %p251
      %p253 = scmp.le.s32.totalorder 1, %s25
      %p254 = scmp.lt.s32.totalorder %s25, 3
      %p255 = pnand %p253, %p254
      %p256 = pneg %p255
      // Predicated region
      $region9: #{tpu_custom_call.1} parent=5 // pred_check
        _
      $region10: #{tpu_custom_call.1} parent=5 // pred_check_branch
        %258 = sbr.rel (%p255) target = $region12
      $region11: #{tpu_custom_call.1} parent=5 // pred_region
        %s259 = ssub.s32 %s25, 1
        // Predicated region
        $region13: #{tpu_custom_call.1} parent=11 // pred_check
          %p260 = pneg %p72
        $region14: #{tpu_custom_call.1} parent=11 // pred_check_branch
          %262 = sbr.rel (%p260) target = $region16
        $region15: #{tpu_custom_call.1} parent=11 // pred_region
          %264 = vsyncadd [#allocation7], 0
          %s265 = sshll.u32 %s1, 4
          %s266 = int_to_ptr.hbm [resolvable:$true] %s265
          %s267 = sshll.u32 [#allocation6], 4
          %s268 = int_to_ptr.vmem [resolvable:$true] %s267
          %273 = dma.hbm_to_vmem [thread:$0]  %s266, 256, %s268, [#allocation7], 128, 128, 8
        $region16: #{tpu_custom_call.1} parent=11 // pred_fallthru
          _
        // Predicated region
        $region17: #{tpu_custom_call.1} parent=11 // pred_check
          %p274 = pneg %p93
        $region18: #{tpu_custom_call.1} parent=11 // pred_check_branch
          %276 = sbr.rel (%p274) target = $region20
        $region19: #{tpu_custom_call.1} parent=11 // pred_region
          %278 = vsyncadd [#allocation7], 0
          %s279 = sshll.u32 %s2, 4
          %s280 = int_to_ptr.hbm [resolvable:$true] %s279
          %s281 = sshll.u32 [#allocation8], 4
          %s282 = int_to_ptr.vmem [resolvable:$true] %s281
          %287 = dma.hbm_to_vmem [thread:$0]  %s280, 512, %s282, [#allocation7], 128, 128, 8
        $region20: #{tpu_custom_call.1} parent=11 // pred_fallthru
          _
        // Predicated region
        $region21: #{tpu_custom_call.1} parent=11 // pred_check
          %p288 = pneg %p114
        $region22: #{tpu_custom_call.1} parent=11 // pred_check_branch
          %290 = sbr.rel (%p288) target = $region24
        $region23: #{tpu_custom_call.1} parent=11 // pred_region
          %292 = vsyncadd [#allocation10], 0
          %s293 = sshll.u32 %s3, 4
          %s294 = int_to_ptr.hbm [resolvable:$true] %s293
          %s295 = sshll.u32 [#allocation9], 4
          %s296 = int_to_ptr.vmem [resolvable:$true] %s295
          %301 = dma.hbm_to_vmem [thread:$0]  %s294, 512, %s296, [#allocation10], 128, 128, 8
        $region24: #{tpu_custom_call.1} parent=11 // pred_fallthru
          _
        // Predicated region
        $region25: #{tpu_custom_call.1} parent=11 // pred_check
          %p302 = pneg %p135
        $region26: #{tpu_custom_call.1} parent=11 // pred_check_branch
          %304 = sbr.rel (%p302) target = $region28
        $region27: #{tpu_custom_call.1} parent=11 // pred_region
          _
        $region28: #{tpu_custom_call.1} parent=11 // pred_fallthru
          _
        // Predicated region
        $region29: #{tpu_custom_call.1} parent=11 // pred_check
          %p305 = pneg %p156
        $region30: #{tpu_custom_call.1} parent=11 // pred_check_branch
          %307 = sbr.rel (%p305) target = $region32
        $region31: #{tpu_custom_call.1} parent=11 // pred_region
          %309 = vsyncadd [#allocation10], 0
          %s310 = sshll.u32 %s5, 4
          %s311 = int_to_ptr.hbm [resolvable:$true] %s310
          %s312 = sshll.u32 [#allocation11], 4
          %s313 = int_to_ptr.vmem [resolvable:$true] %s312
          %318 = dma.hbm_to_vmem [thread:$0]  %s311, 2048, %s313, [#allocation10], 128, 128, 8
        $region32: #{tpu_custom_call.1} parent=11 // pred_fallthru
          _
        // Predicated region
        $region33: #{tpu_custom_call.1} parent=11 // pred_check
          %p319 = pneg %p177
        $region34: #{tpu_custom_call.1} parent=11 // pred_check_branch
          %321 = sbr.rel (%p319) target = $region36
        $region35: #{tpu_custom_call.1} parent=11 // pred_region
          _
        $region36: #{tpu_custom_call.1} parent=11 // pred_fallthru
          _
        // Predicated region
        $region37: #{tpu_custom_call.1} parent=11 // pred_check
          %p322 = pneg %p198
        $region38: #{tpu_custom_call.1} parent=11 // pred_check_branch
          %324 = sbr.rel (%p322) target = $region40
        $region39: #{tpu_custom_call.1} parent=11 // pred_region
          _
        $region40: #{tpu_custom_call.1} parent=11 // pred_fallthru
          _
        // Predicated region
        $region41: #{tpu_custom_call.1} parent=11 // pred_check
          %p325 = pneg %p219
        $region42: #{tpu_custom_call.1} parent=11 // pred_check_branch
          %327 = sbr.rel (%p325) target = $region44
        $region43: #{tpu_custom_call.1} parent=11 // pred_region
          _
        $region44: #{tpu_custom_call.1} parent=11 // pred_fallthru
          _
      $region12: #{tpu_custom_call.1} parent=5 // pred_fallthru
        _
      %p328 = scmp.lt.s32.totalorder %s25, 2
      // Predicated region
      $region45: #{tpu_custom_call.1} parent=5 // pred_check
        %p329 = pneg %p328
      $region46: #{tpu_custom_call.1} parent=5 // pred_check_branch
        %331 = sbr.rel (%p329) target = $region48
      $region47: #{tpu_custom_call.1} parent=5 // pred_region
        // Predicated region
        $region49: #{tpu_custom_call.1} parent=47 // pred_check
          %p332 = pneg %p45
        $region50: #{tpu_custom_call.1} parent=47 // pred_check_branch
          %334 = sbr.rel (%p332) target = $region52
        $region51: #{tpu_custom_call.1} parent=47 // pred_region
          %s335 = sand.u32 %s35, 1
          %s336 = scalar_lea.sflag [#allocation4], %s335
          %s337 = sand.u32 %s35, 1
          %s338 = smul.addr %s337, 8
          %s339 = scalar_lea.vmem [#allocation3], %s338
          %341 = vsyncadd %s336, 0
          %s342 = smul.addr %s25, 8
          %s343 = scalar_lea.hbm %s0, %s342
          %s345 = sshll.u32 %s343, 4
          %s346 = int_to_ptr.hbm [resolvable:$true] %s345
          %s347 = sshll.u32 %s339, 4
          %s348 = int_to_ptr.vmem [resolvable:$true] %s347
          %350 = dma.hbm_to_vmem [thread:$0]  %s346, 128, %s348, %s336
        $region52: #{tpu_custom_call.1} parent=47 // pred_fallthru
          _
      $region48: #{tpu_custom_call.1} parent=5 // pred_fallthru
        _
      %p351 = scmp.le.s32.totalorder 1, %s25
      %p352 = scmp.lt.s32.totalorder %s25, 3
      %p353 = pnand %p351, %p352
      %p354 = pneg %p353
      // Predicated region
      $region53: #{tpu_custom_call.1} parent=5 // pred_check
        _
      $region54: #{tpu_custom_call.1} parent=5 // pred_check_branch
        %356 = sbr.rel (%p353) target = $region56
      $region55: #{tpu_custom_call.1} parent=5 // pred_region
        %s357 = ssub.s32 %s25, 1
        %s358 = sand.u32 %s38, 1
        %s359 = scalar_lea.sflag [#allocation4], %s358
        %s360 = sand.u32 %s38, 1
        %s361 = smul.addr %s360, 8
        %s362 = scalar_lea.vmem [#allocation3], %s361
        // Predicated region
        $region57: #{tpu_custom_call.1} parent=55 // pred_check
          %p363 = pneg %p51
        $region58: #{tpu_custom_call.1} parent=55 // pred_check_branch
          %365 = sbr.rel (%p363) target = $region60
        $region59: #{tpu_custom_call.1} parent=55 // pred_region
          %367 = dma.done %s359, 128
        $region60: #{tpu_custom_call.1} parent=55 // pred_fallthru
          _
        // Predicated region
        $region61: #{tpu_custom_call.1} parent=55 // pred_check
          %p368 = pneg %p72
        $region62: #{tpu_custom_call.1} parent=55 // pred_check_branch
          %370 = sbr.rel (%p368) target = $region64
        $region63: #{tpu_custom_call.1} parent=55 // pred_region
          %372 = dma.done [#allocation7], 256
        $region64: #{tpu_custom_call.1} parent=55 // pred_fallthru
          _
        // Predicated region
        $region65: #{tpu_custom_call.1} parent=55 // pred_check
          %p373 = pneg %p93
        $region66: #{tpu_custom_call.1} parent=55 // pred_check_branch
          %375 = sbr.rel (%p373) target = $region68
        $region67: #{tpu_custom_call.1} parent=55 // pred_region
          %377 = dma.done [#allocation7], 512
        $region68: #{tpu_custom_call.1} parent=55 // pred_fallthru
          _
        // Predicated region
        $region69: #{tpu_custom_call.1} parent=55 // pred_check
          %p378 = pneg %p114
        $region70: #{tpu_custom_call.1} parent=55 // pred_check_branch
          %380 = sbr.rel (%p378) target = $region72
        $region71: #{tpu_custom_call.1} parent=55 // pred_region
          %382 = dma.done [#allocation10], 512
        $region72: #{tpu_custom_call.1} parent=55 // pred_fallthru
          _
        // Predicated region
        $region73: #{tpu_custom_call.1} parent=55 // pred_check
          %p383 = pneg %p156
        $region74: #{tpu_custom_call.1} parent=55 // pred_check_branch
          %385 = sbr.rel (%p383) target = $region76
        $region75: #{tpu_custom_call.1} parent=55 // pred_region
          %387 = dma.done [#allocation10], 2048
        $region76: #{tpu_custom_call.1} parent=55 // pred_fallthru
          _
        %s388 = sand.u32 %s38, 1
        %s389 = scalar_lea.sflag [#allocation4], %s388
        %s390 = sand.u32 %s38, 1
        %s391 = smul.addr %s390, 8
        %s392 = scalar_lea.vmem [#allocation3], %s391
        %p393 = pneg %p51
        %p394 = pneg %p48
        %p395 = pneg %p72
        %p396 = pneg %p69
        %p397 = pneg %p93
        %p398 = pneg %p90
        %p399 = pneg %p114
        %p400 = pneg %p111
        %p401 = pneg %p135
        %p402 = pneg %p132
        %p403 = pneg %p156
        %p404 = pneg %p153
        %p405 = pneg %p177
        %p406 = pneg %p174
        %p407 = pneg %p198
        %p408 = pneg %p195
        %p409 = pneg %p219
        %p410 = pneg %p216
        %p411 = pneg %p245
        %p412 = pneg %p242
        %s413 = sand.u32 %s232, 1
        %s414 = scalar_lea.sflag [#allocation5], %s413
        %s415 = sand.u32 %s232, 1
        %s416 = smul.addr %s415, 8
        %s417 = scalar_lea.vmem [#allocation12], %s416
        %v418 = vld [vmem:[%s362] sm:$0xff]
        %v419 = vld [vmem:[#allocation8] sm:$0xff]
        %v420 = vld [vmem:[#allocation8 + $0x8] sm:$0xff]
        %v421 = vld [vmem:[#allocation8 + $0x10] sm:$0xff]
        %v422 = vld [vmem:[#allocation8 + $0x18] sm:$0xff]
        %vm423 = vcmask 261120
        %v425 = vsel %vm423, %v418, 0
        %427 = vmatpush.msra.mxu0 0.0
        %428 = vmatpush.msra.mxu0 0.0
        %429 = vmatpush.msra.mxu0 0.0
        %430 = vmatpush.msra.mxu0 0.0
        %431 = vmatpush.msra.mxu0 0.0
        %432 = vmatpush.msra.mxu0 0.0
        %433 = vmatpush.msra.mxu0 0.0
        %434 = vmatpush.msra.mxu0 0.0
        %435 = vmatpush.msra.mxu0 0.0
        %436 = vmatpush.msra.mxu0 0.0
        %437 = vmatpush.msra.mxu0 0.0
        %438 = vmatpush.msra.mxu0 0.0
        %439 = vmatpush.msra.mxu0 %v422
        %440 = vmatpush.msra.mxu0 %v421
        %441 = vmatpush.msra.mxu0 %v420
        %442 = vmatpush.msra.mxu0 %v419
        %443 = vmatmul.f32.gmra.mxu0 %v425
        %v444 = vpop.f32.mrf.mxu0
        %v445 = vadd.f32 0.0, %v444
        %446 = vdwg.mxu0
        %v447 = vld [vmem:[#allocation6] sm:$0xff]
        %v448 = vld [vmem:[#allocation6 + $0x8] sm:$0xff]
        %v449 = vld [vmem:[#allocation9] sm:$0xff]
        %v450 = vld [vmem:[#allocation9 + $0x8] sm:$0xff]
        %v451 = vld [vmem:[#allocation9 + $0x10] sm:$0xff]
        %v452 = vld [vmem:[#allocation9 + $0x18] sm:$0xff]
        %v453 = vld [vmem:[%s4] sm:$0x1]
        %v455 = vperm.slane %v453, 0
        %v458 = vsel %vm423, %v447, 0
        %v461 = vsel %vm423, %v448, 0
        %463 = vmatpush.msra.mxu0 0.0
        %464 = vmatpush.msra.mxu0 0.0
        %465 = vmatpush.msra.mxu0 0.0
        %466 = vmatpush.msra.mxu0 0.0
        %467 = vmatpush.msra.mxu0 0.0
        %468 = vmatpush.msra.mxu0 0.0
        %469 = vmatpush.msra.mxu0 0.0
        %470 = vmatpush.msra.mxu0 0.0
        %471 = vmatpush.msra.mxu0 0.0
        %472 = vmatpush.msra.mxu0 0.0
        %473 = vmatpush.msra.mxu0 0.0
        %474 = vmatpush.msra.mxu0 0.0
        %475 = vmatpush.msra.mxu0 %v452
        %476 = vmatpush.msra.mxu0 %v451
        %477 = vmatpush.msra.mxu0 %v450
        %478 = vmatpush.msra.mxu0 %v449
        %479 = vmatmul.f32.gmra.mxu0 %v458
        %v480 = vpop.f32.mrf.mxu0
        %v481 = vadd.f32 %v455, %v480
        %482 = vmatmul.f32.gmra.mxu0 %v461
        %v483 = vpop.f32.mrf.mxu0
        %v484 = vadd.f32 %v455, %v483
        %485 = vdwg.mxu0
        %v487 = vrot.slane %v445, 1
        %v488 = vrot.slane %v445, 2
        %v489 = vrot.slane %v445, 3
        %v490 = vrot.slane %v445, 4
        %v491 = vrot.slane %v445, 5
        %v492 = vrot.slane %v445, 6
        %v493 = vrot.slane %v445, 7
        %v494 = vperm.slane %v445, 0
        %v495 = vperm.slane %v487, 0
        %v496 = vperm.slane %v488, 0
        %v497 = vperm.slane %v489, 0
        %v498 = vperm.slane %v490, 0
        %v499 = vperm.slane %v491, 0
        %v500 = vperm.slane %v492, 0
        %v501 = vperm.slane %v493, 0
        %v510 = vadd.f32 %v494, %v481
        %v511 = vadd.f32 %v494, %v484
        %v512 = vadd.f32 %v495, %v481
        %v513 = vadd.f32 %v495, %v484
        %v514 = vadd.f32 %v496, %v481
        %v515 = vadd.f32 %v496, %v484
        %v516 = vadd.f32 %v497, %v481
        %v517 = vadd.f32 %v497, %v484
        %v518 = vadd.f32 %v498, %v481
        %v519 = vadd.f32 %v498, %v484
        %v520 = vadd.f32 %v499, %v481
        %v521 = vadd.f32 %v499, %v484
        %v522 = vadd.f32 %v500, %v481
        %v523 = vadd.f32 %v500, %v484
        %v524 = vadd.f32 %v501, %v481
        %v525 = vadd.f32 %v501, %v484
        %v526 = vmul.f32 %v510, 0.5
        %v527 = vmul.f32 %v511, 0.5
        %v528 = vmul.f32 %v512, 0.5
        %v529 = vmul.f32 %v513, 0.5
        %v530 = vmul.f32 %v514, 0.5
        %v531 = vmul.f32 %v515, 0.5
        %v532 = vmul.f32 %v516, 0.5
        %v533 = vmul.f32 %v517, 0.5
        %v534 = vmul.f32 %v518, 0.5
        %v535 = vmul.f32 %v519, 0.5
        %v536 = vmul.f32 %v520, 0.5
        %v537 = vmul.f32 %v521, 0.5
        %v538 = vmul.f32 %v522, 0.5
        %v539 = vmul.f32 %v523, 0.5
        %v540 = vmul.f32 %v524, 0.5
        %v541 = vmul.f32 %v525, 0.5
        %v542 = vmul.f32 %v510, 0.70710677
        %v543 = vmul.f32 %v511, 0.70710677
        %v544 = vmul.f32 %v512, 0.70710677
        %v545 = vmul.f32 %v513, 0.70710677
        %v546 = vmul.f32 %v514, 0.70710677
        %v547 = vmul.f32 %v515, 0.70710677
        %v548 = vmul.f32 %v516, 0.70710677
        %v549 = vmul.f32 %v517, 0.70710677
        %v550 = vmul.f32 %v518, 0.70710677
        %v551 = vmul.f32 %v519, 0.70710677
        %v552 = vmul.f32 %v520, 0.70710677
        %v553 = vmul.f32 %v521, 0.70710677
        %v554 = vmul.f32 %v522, 0.70710677
        %v555 = vmul.f32 %v523, 0.70710677
        %v556 = vmul.f32 %v524, 0.70710677
        %v557 = vmul.f32 %v525, 0.70710677
        %v558 = vmul.f32 %v542, %v542
        %v559 = vmin.f32 16.0, %v558
        %v560 = vmul.f32 %v559, 2.1237322e-06
        %v561 = vadd.f32 %v560, 0.00028619796
        %v562 = vmul.f32 %v559, %v561
        %v563 = vadd.f32 %v562, 0.0036580483
        %v564 = vmul.f32 %v559, %v563
        %v565 = vadd.f32 %v564, 0.05243302
        %v566 = vmul.f32 %v559, %v565
        %v567 = vadd.f32 %v566, 0.18741608
        %v568 = vmul.f32 %v559, %v567
        %v569 = vadd.f32 %v568, 1.1283791
        %v570 = vmul.f32 %v542, %v569
        %v571 = vmul.f32 %v559, 3.8918573e-05
        %v572 = vadd.f32 %v571, 0.001143296
        %v573 = vmul.f32 %v559, %v572
        %v574 = vadd.f32 %v573, 0.014752088
        %v575 = vmul.f32 %v559, %v574
        %v576 = vadd.f32 %v575, 0.112945676
        %v577 = vmul.f32 %v559, %v576
        %v578 = vadd.f32 %v577, 0.4994258
        %v579 = vmul.f32 %v559, %v578
        %v580 = vadd.f32 %v579, 1.0
        %v581 = vrcp.pop %v580
        %v582 = vmul.f32 %v580, %v581
        %v583 = vsub.f32 1.0, %v582
        %v584 = vmul.f32 %v581, %v583
        %v585 = vadd.f32 %v581, %v584
        %vm586 = vweird.f32 %v580
        %vm587 = vweird.f32 %v581
        %vm588 = vmor %vm586, %vm587
        %v589 = vsel %vm588, %v581, %v585
        %v590 = vand.u32 2147483647, %v580
        %vm591 = vcmp.eq.f32.partialorder %v590, 8.507059e+37
        %v592 = vand.u32 %v580, 2147483648
        %v593 = vor.u32 1.1754944e-38, %v592
        %v594 = vsel %vm591, %v593, %v589
        %v595 = vmul.f32 %v570, %v594
        %v596 = vmin.f32 %v595, 1.0
        %v597 = vmax.f32 %v596, -1.0
        %v598 = vmul.f32 %v543, %v543
        %v599 = vmin.f32 16.0, %v598
        %v600 = vmul.f32 %v599, 2.1237322e-06
        %v601 = vadd.f32 %v600, 0.00028619796
        %v602 = vmul.f32 %v599, %v601
        %v603 = vadd.f32 %v602, 0.0036580483
        %v604 = vmul.f32 %v599, %v603
        %v605 = vadd.f32 %v604, 0.05243302
        %v606 = vmul.f32 %v599, %v605
        %v607 = vadd.f32 %v606, 0.18741608
        %v608 = vmul.f32 %v599, %v607
        %v609 = vadd.f32 %v608, 1.1283791
        %v610 = vmul.f32 %v543, %v609
        %v611 = vmul.f32 %v599, 3.8918573e-05
        %v612 = vadd.f32 %v611, 0.001143296
        %v613 = vmul.f32 %v599, %v612
        %v614 = vadd.f32 %v613, 0.014752088
        %v615 = vmul.f32 %v599, %v614
        %v616 = vadd.f32 %v615, 0.112945676
        %v617 = vmul.f32 %v599, %v616
        %v618 = vadd.f32 %v617, 0.4994258
        %v619 = vmul.f32 %v599, %v618
        %v620 = vadd.f32 %v619, 1.0
        %v621 = vrcp.pop %v620
        %v622 = vmul.f32 %v620, %v621
        %v623 = vsub.f32 1.0, %v622
        %v624 = vmul.f32 %v621, %v623
        %v625 = vadd.f32 %v621, %v624
        %vm626 = vweird.f32 %v620
        %vm627 = vweird.f32 %v621
        %vm628 = vmor %vm626, %vm627
        %v629 = vsel %vm628, %v621, %v625
        %v630 = vand.u32 2147483647, %v620
        %vm631 = vcmp.eq.f32.partialorder %v630, 8.507059e+37
        %v632 = vand.u32 %v620, 2147483648
        %v633 = vor.u32 1.1754944e-38, %v632
        %v634 = vsel %vm631, %v633, %v629
        %v635 = vmul.f32 %v610, %v634
        %v636 = vmin.f32 %v635, 1.0
        %v637 = vmax.f32 %v636, -1.0
        %v638 = vmul.f32 %v544, %v544
        %v639 = vmin.f32 16.0, %v638
        %v640 = vmul.f32 %v639, 2.1237322e-06
        %v641 = vadd.f32 %v640, 0.00028619796
        %v642 = vmul.f32 %v639, %v641
        %v643 = vadd.f32 %v642, 0.0036580483
        %v644 = vmul.f32 %v639, %v643
        %v645 = vadd.f32 %v644, 0.05243302
        %v646 = vmul.f32 %v639, %v645
        %v647 = vadd.f32 %v646, 0.18741608
        %v648 = vmul.f32 %v639, %v647
        %v649 = vadd.f32 %v648, 1.1283791
        %v650 = vmul.f32 %v544, %v649
        %v651 = vmul.f32 %v639, 3.8918573e-05
        %v652 = vadd.f32 %v651, 0.001143296
        %v653 = vmul.f32 %v639, %v652
        %v654 = vadd.f32 %v653, 0.014752088
        %v655 = vmul.f32 %v639, %v654
        %v656 = vadd.f32 %v655, 0.112945676
        %v657 = vmul.f32 %v639, %v656
        %v658 = vadd.f32 %v657, 0.4994258
        %v659 = vmul.f32 %v639, %v658
        %v660 = vadd.f32 %v659, 1.0
        %v661 = vrcp.pop %v660
        %v662 = vmul.f32 %v660, %v661
        %v663 = vsub.f32 1.0, %v662
        %v664 = vmul.f32 %v661, %v663
        %v665 = vadd.f32 %v661, %v664
        %vm666 = vweird.f32 %v660
        %vm667 = vweird.f32 %v661
        %vm668 = vmor %vm666, %vm667
        %v669 = vsel %vm668, %v661, %v665
        %v670 = vand.u32 2147483647, %v660
        %vm671 = vcmp.eq.f32.partialorder %v670, 8.507059e+37
        %v672 = vand.u32 %v660, 2147483648
        %v673 = vor.u32 1.1754944e-38, %v672
        %v674 = vsel %vm671, %v673, %v669
        %v675 = vmul.f32 %v650, %v674
        %v676 = vmin.f32 %v675, 1.0
        %v677 = vmax.f32 %v676, -1.0
        %v678 = vmul.f32 %v545, %v545
        %v679 = vmin.f32 16.0, %v678
        %v680 = vmul.f32 %v679, 2.1237322e-06
        %v681 = vadd.f32 %v680, 0.00028619796
        %v682 = vmul.f32 %v679, %v681
        %v683 = vadd.f32 %v682, 0.0036580483
        %v684 = vmul.f32 %v679, %v683
        %v685 = vadd.f32 %v684, 0.05243302
        %v686 = vmul.f32 %v679, %v685
        %v687 = vadd.f32 %v686, 0.18741608
        %v688 = vmul.f32 %v679, %v687
        %v689 = vadd.f32 %v688, 1.1283791
        %v690 = vmul.f32 %v545, %v689
        %v691 = vmul.f32 %v679, 3.8918573e-05
        %v692 = vadd.f32 %v691, 0.001143296
        %v693 = vmul.f32 %v679, %v692
        %v694 = vadd.f32 %v693, 0.014752088
        %v695 = vmul.f32 %v679, %v694
        %v696 = vadd.f32 %v695, 0.112945676
        %v697 = vmul.f32 %v679, %v696
        %v698 = vadd.f32 %v697, 0.4994258
        %v699 = vmul.f32 %v679, %v698
        %v700 = vadd.f32 %v699, 1.0
        %v701 = vrcp.pop %v700
        %v702 = vmul.f32 %v700, %v701
        %v703 = vsub.f32 1.0, %v702
        %v704 = vmul.f32 %v701, %v703
        %v705 = vadd.f32 %v701, %v704
        %vm706 = vweird.f32 %v700
        %vm707 = vweird.f32 %v701
        %vm708 = vmor %vm706, %vm707
        %v709 = vsel %vm708, %v701, %v705
        %v710 = vand.u32 2147483647, %v700
        %vm711 = vcmp.eq.f32.partialorder %v710, 8.507059e+37
        %v712 = vand.u32 %v700, 2147483648
        %v713 = vor.u32 1.1754944e-38, %v712
        %v714 = vsel %vm711, %v713, %v709
        %v715 = vmul.f32 %v690, %v714
        %v716 = vmin.f32 %v715, 1.0
        %v717 = vmax.f32 %v716, -1.0
        %v718 = vmul.f32 %v546, %v546
        %v719 = vmin.f32 16.0, %v718
        %v720 = vmul.f32 %v719, 2.1237322e-06
        %v721 = vadd.f32 %v720, 0.00028619796
        %v722 = vmul.f32 %v719, %v721
        %v723 = vadd.f32 %v722, 0.0036580483
        %v724 = vmul.f32 %v719, %v723
        %v725 = vadd.f32 %v724, 0.05243302
        %v726 = vmul.f32 %v719, %v725
        %v727 = vadd.f32 %v726, 0.18741608
        %v728 = vmul.f32 %v719, %v727
        %v729 = vadd.f32 %v728, 1.1283791
        %v730 = vmul.f32 %v546, %v729
        %v731 = vmul.f32 %v719, 3.8918573e-05
        %v732 = vadd.f32 %v731, 0.001143296
        %v733 = vmul.f32 %v719, %v732
        %v734 = vadd.f32 %v733, 0.014752088
        %v735 = vmul.f32 %v719, %v734
        %v736 = vadd.f32 %v735, 0.112945676
        %v737 = vmul.f32 %v719, %v736
        %v738 = vadd.f32 %v737, 0.4994258
        %v739 = vmul.f32 %v719, %v738
        %v740 = vadd.f32 %v739, 1.0
        %v741 = vrcp.pop %v740
        %v742 = vmul.f32 %v740, %v741
        %v743 = vsub.f32 1.0, %v742
        %v744 = vmul.f32 %v741, %v743
        %v745 = vadd.f32 %v741, %v744
        %vm746 = vweird.f32 %v740
        %vm747 = vweird.f32 %v741
        %vm748 = vmor %vm746, %vm747
        %v749 = vsel %vm748, %v741, %v745
        %v750 = vand.u32 2147483647, %v740
        %vm751 = vcmp.eq.f32.partialorder %v750, 8.507059e+37
        %v752 = vand.u32 %v740, 2147483648
        %v753 = vor.u32 1.1754944e-38, %v752
        %v754 = vsel %vm751, %v753, %v749
        %v755 = vmul.f32 %v730, %v754
        %v756 = vmin.f32 %v755, 1.0
        %v757 = vmax.f32 %v756, -1.0
        %v758 = vmul.f32 %v547, %v547
        %v759 = vmin.f32 16.0, %v758
        %v760 = vmul.f32 %v759, 2.1237322e-06
        %v761 = vadd.f32 %v760, 0.00028619796
        %v762 = vmul.f32 %v759, %v761
        %v763 = vadd.f32 %v762, 0.0036580483
        %v764 = vmul.f32 %v759, %v763
        %v765 = vadd.f32 %v764, 0.05243302
        %v766 = vmul.f32 %v759, %v765
        %v767 = vadd.f32 %v766, 0.18741608
        %v768 = vmul.f32 %v759, %v767
        %v769 = vadd.f32 %v768, 1.1283791
        %v770 = vmul.f32 %v547, %v769
        %v771 = vmul.f32 %v759, 3.8918573e-05
        %v772 = vadd.f32 %v771, 0.001143296
        %v773 = vmul.f32 %v759, %v772
        %v774 = vadd.f32 %v773, 0.014752088
        %v775 = vmul.f32 %v759, %v774
        %v776 = vadd.f32 %v775, 0.112945676
        %v777 = vmul.f32 %v759, %v776
        %v778 = vadd.f32 %v777, 0.4994258
        %v779 = vmul.f32 %v759, %v778
        %v780 = vadd.f32 %v779, 1.0
        %v781 = vrcp.pop %v780
        %v782 = vmul.f32 %v780, %v781
        %v783 = vsub.f32 1.0, %v782
        %v784 = vmul.f32 %v781, %v783
        %v785 = vadd.f32 %v781, %v784
        %vm786 = vweird.f32 %v780
        %vm787 = vweird.f32 %v781
        %vm788 = vmor %vm786, %vm787
        %v789 = vsel %vm788, %v781, %v785
        %v790 = vand.u32 2147483647, %v780
        %vm791 = vcmp.eq.f32.partialorder %v790, 8.507059e+37
        %v792 = vand.u32 %v780, 2147483648
        %v793 = vor.u32 1.1754944e-38, %v792
        %v794 = vsel %vm791, %v793, %v789
        %v795 = vmul.f32 %v770, %v794
        %v796 = vmin.f32 %v795, 1.0
        %v797 = vmax.f32 %v796, -1.0
        %v798 = vmul.f32 %v548, %v548
        %v799 = vmin.f32 16.0, %v798
        %v800 = vmul.f32 %v799, 2.1237322e-06
        %v801 = vadd.f32 %v800, 0.00028619796
        %v802 = vmul.f32 %v799, %v801
        %v803 = vadd.f32 %v802, 0.0036580483
        %v804 = vmul.f32 %v799, %v803
        %v805 = vadd.f32 %v804, 0.05243302
        %v806 = vmul.f32 %v799, %v805
        %v807 = vadd.f32 %v806, 0.18741608
        %v808 = vmul.f32 %v799, %v807
        %v809 = vadd.f32 %v808, 1.1283791
        %v810 = vmul.f32 %v548, %v809
        %v811 = vmul.f32 %v799, 3.8918573e-05
        %v812 = vadd.f32 %v811, 0.001143296
        %v813 = vmul.f32 %v799, %v812
        %v814 = vadd.f32 %v813, 0.014752088
        %v815 = vmul.f32 %v799, %v814
        %v816 = vadd.f32 %v815, 0.112945676
        %v817 = vmul.f32 %v799, %v816
        %v818 = vadd.f32 %v817, 0.4994258
        %v819 = vmul.f32 %v799, %v818
        %v820 = vadd.f32 %v819, 1.0
        %v821 = vrcp.pop %v820
        %v822 = vmul.f32 %v820, %v821
        %v823 = vsub.f32 1.0, %v822
        %v824 = vmul.f32 %v821, %v823
        %v825 = vadd.f32 %v821, %v824
        %vm826 = vweird.f32 %v820
        %vm827 = vweird.f32 %v821
        %vm828 = vmor %vm826, %vm827
        %v829 = vsel %vm828, %v821, %v825
        %v830 = vand.u32 2147483647, %v820
        %vm831 = vcmp.eq.f32.partialorder %v830, 8.507059e+37
        %v832 = vand.u32 %v820, 2147483648
        %v833 = vor.u32 1.1754944e-38, %v832
        %v834 = vsel %vm831, %v833, %v829
        %v835 = vmul.f32 %v810, %v834
        %v836 = vmin.f32 %v835, 1.0
        %v837 = vmax.f32 %v836, -1.0
        %v838 = vmul.f32 %v549, %v549
        %v839 = vmin.f32 16.0, %v838
        %v840 = vmul.f32 %v839, 2.1237322e-06
        %v841 = vadd.f32 %v840, 0.00028619796
        %v842 = vmul.f32 %v839, %v841
        %v843 = vadd.f32 %v842, 0.0036580483
        %v844 = vmul.f32 %v839, %v843
        %v845 = vadd.f32 %v844, 0.05243302
        %v846 = vmul.f32 %v839, %v845
        %v847 = vadd.f32 %v846, 0.18741608
        %v848 = vmul.f32 %v839, %v847
        %v849 = vadd.f32 %v848, 1.1283791
        %v850 = vmul.f32 %v549, %v849
        %v851 = vmul.f32 %v839, 3.8918573e-05
        %v852 = vadd.f32 %v851, 0.001143296
        %v853 = vmul.f32 %v839, %v852
        %v854 = vadd.f32 %v853, 0.014752088
        %v855 = vmul.f32 %v839, %v854
        %v856 = vadd.f32 %v855, 0.112945676
        %v857 = vmul.f32 %v839, %v856
        %v858 = vadd.f32 %v857, 0.4994258
        %v859 = vmul.f32 %v839, %v858
        %v860 = vadd.f32 %v859, 1.0
        %v861 = vrcp.pop %v860
        %v862 = vmul.f32 %v860, %v861
        %v863 = vsub.f32 1.0, %v862
        %v864 = vmul.f32 %v861, %v863
        %v865 = vadd.f32 %v861, %v864
        %vm866 = vweird.f32 %v860
        %vm867 = vweird.f32 %v861
        %vm868 = vmor %vm866, %vm867
        %v869 = vsel %vm868, %v861, %v865
        %v870 = vand.u32 2147483647, %v860
        %vm871 = vcmp.eq.f32.partialorder %v870, 8.507059e+37
        %v872 = vand.u32 %v860, 2147483648
        %v873 = vor.u32 1.1754944e-38, %v872
        %v874 = vsel %vm871, %v873, %v869
        %v875 = vmul.f32 %v850, %v874
        %v876 = vmin.f32 %v875, 1.0
        %v877 = vmax.f32 %v876, -1.0
        %v878 = vmul.f32 %v550, %v550
        %v879 = vmin.f32 16.0, %v878
        %v880 = vmul.f32 %v879, 2.1237322e-06
        %v881 = vadd.f32 %v880, 0.00028619796
        %v882 = vmul.f32 %v879, %v881
        %v883 = vadd.f32 %v882, 0.0036580483
        %v884 = vmul.f32 %v879, %v883
        %v885 = vadd.f32 %v884, 0.05243302
        %v886 = vmul.f32 %v879, %v885
        %v887 = vadd.f32 %v886, 0.18741608
        %v888 = vmul.f32 %v879, %v887
        %v889 = vadd.f32 %v888, 1.1283791
        %v890 = vmul.f32 %v550, %v889
        %v891 = vmul.f32 %v879, 3.8918573e-05
        %v892 = vadd.f32 %v891, 0.001143296
        %v893 = vmul.f32 %v879, %v892
        %v894 = vadd.f32 %v893, 0.014752088
        %v895 = vmul.f32 %v879, %v894
        %v896 = vadd.f32 %v895, 0.112945676
        %v897 = vmul.f32 %v879, %v896
        %v898 = vadd.f32 %v897, 0.4994258
        %v899 = vmul.f32 %v879, %v898
        %v900 = vadd.f32 %v899, 1.0
        %v901 = vrcp.pop %v900
        %v902 = vmul.f32 %v900, %v901
        %v903 = vsub.f32 1.0, %v902
        %v904 = vmul.f32 %v901, %v903
        %v905 = vadd.f32 %v901, %v904
        %vm906 = vweird.f32 %v900
        %vm907 = vweird.f32 %v901
        %vm908 = vmor %vm906, %vm907
        %v909 = vsel %vm908, %v901, %v905
        %v910 = vand.u32 2147483647, %v900
        %vm911 = vcmp.eq.f32.partialorder %v910, 8.507059e+37
        %v912 = vand.u32 %v900, 2147483648
        %v913 = vor.u32 1.1754944e-38, %v912
        %v914 = vsel %vm911, %v913, %v909
        %v915 = vmul.f32 %v890, %v914
        %v916 = vmin.f32 %v915, 1.0
        %v917 = vmax.f32 %v916, -1.0
        %v918 = vmul.f32 %v551, %v551
        %v919 = vmin.f32 16.0, %v918
        %v920 = vmul.f32 %v919, 2.1237322e-06
        %v921 = vadd.f32 %v920, 0.00028619796
        %v922 = vmul.f32 %v919, %v921
        %v923 = vadd.f32 %v922, 0.0036580483
        %v924 = vmul.f32 %v919, %v923
        %v925 = vadd.f32 %v924, 0.05243302
        %v926 = vmul.f32 %v919, %v925
        %v927 = vadd.f32 %v926, 0.18741608
        %v928 = vmul.f32 %v919, %v927
        %v929 = vadd.f32 %v928, 1.1283791
        %v930 = vmul.f32 %v551, %v929
        %v931 = vmul.f32 %v919, 3.8918573e-05
        %v932 = vadd.f32 %v931, 0.001143296
        %v933 = vmul.f32 %v919, %v932
        %v934 = vadd.f32 %v933, 0.014752088
        %v935 = vmul.f32 %v919, %v934
        %v936 = vadd.f32 %v935, 0.112945676
        %v937 = vmul.f32 %v919, %v936
        %v938 = vadd.f32 %v937, 0.4994258
        %v939 = vmul.f32 %v919, %v938
        %v940 = vadd.f32 %v939, 1.0
        %v941 = vrcp.pop %v940
        %v942 = vmul.f32 %v940, %v941
        %v943 = vsub.f32 1.0, %v942
        %v944 = vmul.f32 %v941, %v943
        %v945 = vadd.f32 %v941, %v944
        %vm946 = vweird.f32 %v940
        %vm947 = vweird.f32 %v941
        %vm948 = vmor %vm946, %vm947
        %v949 = vsel %vm948, %v941, %v945
        %v950 = vand.u32 2147483647, %v940
        %vm951 = vcmp.eq.f32.partialorder %v950, 8.507059e+37
        %v952 = vand.u32 %v940, 2147483648
        %v953 = vor.u32 1.1754944e-38, %v952
        %v954 = vsel %vm951, %v953, %v949
        %v955 = vmul.f32 %v930, %v954
        %v956 = vmin.f32 %v955, 1.0
        %v957 = vmax.f32 %v956, -1.0
        %v958 = vmul.f32 %v552, %v552
        %v959 = vmin.f32 16.0, %v958
        %v960 = vmul.f32 %v959, 2.1237322e-06
        %v961 = vadd.f32 %v960, 0.00028619796
        %v962 = vmul.f32 %v959, %v961
        %v963 = vadd.f32 %v962, 0.0036580483
        %v964 = vmul.f32 %v959, %v963
        %v965 = vadd.f32 %v964, 0.05243302
        %v966 = vmul.f32 %v959, %v965
        %v967 = vadd.f32 %v966, 0.18741608
        %v968 = vmul.f32 %v959, %v967
        %v969 = vadd.f32 %v968, 1.1283791
        %v970 = vmul.f32 %v552, %v969
        %v971 = vmul.f32 %v959, 3.8918573e-05
        %v972 = vadd.f32 %v971, 0.001143296
        %v973 = vmul.f32 %v959, %v972
        %v974 = vadd.f32 %v973, 0.014752088
        %v975 = vmul.f32 %v959, %v974
        %v976 = vadd.f32 %v975, 0.112945676
        %v977 = vmul.f32 %v959, %v976
        %v978 = vadd.f32 %v977, 0.4994258
        %v979 = vmul.f32 %v959, %v978
        %v980 = vadd.f32 %v979, 1.0
        %v981 = vrcp.pop %v980
        %v982 = vmul.f32 %v980, %v981
        %v983 = vsub.f32 1.0, %v982
        %v984 = vmul.f32 %v981, %v983
        %v985 = vadd.f32 %v981, %v984
        %vm986 = vweird.f32 %v980
        %vm987 = vweird.f32 %v981
        %vm988 = vmor %vm986, %vm987
        %v989 = vsel %vm988, %v981, %v985
        %v990 = vand.u32 2147483647, %v980
        %vm991 = vcmp.eq.f32.partialorder %v990, 8.507059e+37
        %v992 = vand.u32 %v980, 2147483648
        %v993 = vor.u32 1.1754944e-38, %v992
        %v994 = vsel %vm991, %v993, %v989
        %v995 = vmul.f32 %v970, %v994
        %v996 = vmin.f32 %v995, 1.0
        %v997 = vmax.f32 %v996, -1.0
        %v998 = vmul.f32 %v553, %v553
        %v999 = vmin.f32 16.0, %v998
        %v1000 = vmul.f32 %v999, 2.1237322e-06
        %v1001 = vadd.f32 %v1000, 0.00028619796
        %v1002 = vmul.f32 %v999, %v1001
        %v1003 = vadd.f32 %v1002, 0.0036580483
        %v1004 = vmul.f32 %v999, %v1003
        %v1005 = vadd.f32 %v1004, 0.05243302
        %v1006 = vmul.f32 %v999, %v1005
        %v1007 = vadd.f32 %v1006, 0.18741608
        %v1008 = vmul.f32 %v999, %v1007
        %v1009 = vadd.f32 %v1008, 1.1283791
        %v1010 = vmul.f32 %v553, %v1009
        %v1011 = vmul.f32 %v999, 3.8918573e-05
        %v1012 = vadd.f32 %v1011, 0.001143296
        %v1013 = vmul.f32 %v999, %v1012
        %v1014 = vadd.f32 %v1013, 0.014752088
        %v1015 = vmul.f32 %v999, %v1014
        %v1016 = vadd.f32 %v1015, 0.112945676
        %v1017 = vmul.f32 %v999, %v1016
        %v1018 = vadd.f32 %v1017, 0.4994258
        %v1019 = vmul.f32 %v999, %v1018
        %v1020 = vadd.f32 %v1019, 1.0
        %v1021 = vrcp.pop %v1020
        %v1022 = vmul.f32 %v1020, %v1021
        %v1023 = vsub.f32 1.0, %v1022
        %v1024 = vmul.f32 %v1021, %v1023
        %v1025 = vadd.f32 %v1021, %v1024
        %vm1026 = vweird.f32 %v1020
        %vm1027 = vweird.f32 %v1021
        %vm1028 = vmor %vm1026, %vm1027
        %v1029 = vsel %vm1028, %v1021, %v1025
        %v1030 = vand.u32 2147483647, %v1020
        %vm1031 = vcmp.eq.f32.partialorder %v1030, 8.507059e+37
        %v1032 = vand.u32 %v1020, 2147483648
        %v1033 = vor.u32 1.1754944e-38, %v1032
        %v1034 = vsel %vm1031, %v1033, %v1029
        %v1035 = vmul.f32 %v1010, %v1034
        %v1036 = vmin.f32 %v1035, 1.0
        %v1037 = vmax.f32 %v1036, -1.0
        %v1038 = vmul.f32 %v554, %v554
        %v1039 = vmin.f32 16.0, %v1038
        %v1040 = vmul.f32 %v1039, 2.1237322e-06
        %v1041 = vadd.f32 %v1040, 0.00028619796
        %v1042 = vmul.f32 %v1039, %v1041
        %v1043 = vadd.f32 %v1042, 0.0036580483
        %v1044 = vmul.f32 %v1039, %v1043
        %v1045 = vadd.f32 %v1044, 0.05243302
        %v1046 = vmul.f32 %v1039, %v1045
        %v1047 = vadd.f32 %v1046, 0.18741608
        %v1048 = vmul.f32 %v1039, %v1047
        %v1049 = vadd.f32 %v1048, 1.1283791
        %v1050 = vmul.f32 %v554, %v1049
        %v1051 = vmul.f32 %v1039, 3.8918573e-05
        %v1052 = vadd.f32 %v1051, 0.001143296
        %v1053 = vmul.f32 %v1039, %v1052
        %v1054 = vadd.f32 %v1053, 0.014752088
        %v1055 = vmul.f32 %v1039, %v1054
        %v1056 = vadd.f32 %v1055, 0.112945676
        %v1057 = vmul.f32 %v1039, %v1056
        %v1058 = vadd.f32 %v1057, 0.4994258
        %v1059 = vmul.f32 %v1039, %v1058
        %v1060 = vadd.f32 %v1059, 1.0
        %v1061 = vrcp.pop %v1060
        %v1062 = vmul.f32 %v1060, %v1061
        %v1063 = vsub.f32 1.0, %v1062
        %v1064 = vmul.f32 %v1061, %v1063
        %v1065 = vadd.f32 %v1061, %v1064
        %vm1066 = vweird.f32 %v1060
        %vm1067 = vweird.f32 %v1061
        %vm1068 = vmor %vm1066, %vm1067
        %v1069 = vsel %vm1068, %v1061, %v1065
        %v1070 = vand.u32 2147483647, %v1060
        %vm1071 = vcmp.eq.f32.partialorder %v1070, 8.507059e+37
        %v1072 = vand.u32 %v1060, 2147483648
        %v1073 = vor.u32 1.1754944e-38, %v1072
        %v1074 = vsel %vm1071, %v1073, %v1069
        %v1075 = vmul.f32 %v1050, %v1074
        %v1076 = vmin.f32 %v1075, 1.0
        %v1077 = vmax.f32 %v1076, -1.0
        %v1078 = vmul.f32 %v555, %v555
        %v1079 = vmin.f32 16.0, %v1078
        %v1080 = vmul.f32 %v1079, 2.1237322e-06
        %v1081 = vadd.f32 %v1080, 0.00028619796
        %v1082 = vmul.f32 %v1079, %v1081
        %v1083 = vadd.f32 %v1082, 0.0036580483
        %v1084 = vmul.f32 %v1079, %v1083
        %v1085 = vadd.f32 %v1084, 0.05243302
        %v1086 = vmul.f32 %v1079, %v1085
        %v1087 = vadd.f32 %v1086, 0.18741608
        %v1088 = vmul.f32 %v1079, %v1087
        %v1089 = vadd.f32 %v1088, 1.1283791
        %v1090 = vmul.f32 %v555, %v1089
        %v1091 = vmul.f32 %v1079, 3.8918573e-05
        %v1092 = vadd.f32 %v1091, 0.001143296
        %v1093 = vmul.f32 %v1079, %v1092
        %v1094 = vadd.f32 %v1093, 0.014752088
        %v1095 = vmul.f32 %v1079, %v1094
        %v1096 = vadd.f32 %v1095, 0.112945676
        %v1097 = vmul.f32 %v1079, %v1096
        %v1098 = vadd.f32 %v1097, 0.4994258
        %v1099 = vmul.f32 %v1079, %v1098
        %v1100 = vadd.f32 %v1099, 1.0
        %v1101 = vrcp.pop %v1100
        %v1102 = vmul.f32 %v1100, %v1101
        %v1103 = vsub.f32 1.0, %v1102
        %v1104 = vmul.f32 %v1101, %v1103
        %v1105 = vadd.f32 %v1101, %v1104
        %vm1106 = vweird.f32 %v1100
        %vm1107 = vweird.f32 %v1101
        %vm1108 = vmor %vm1106, %vm1107
        %v1109 = vsel %vm1108, %v1101, %v1105
        %v1110 = vand.u32 2147483647, %v1100
        %vm1111 = vcmp.eq.f32.partialorder %v1110, 8.507059e+37
        %v1112 = vand.u32 %v1100, 2147483648
        %v1113 = vor.u32 1.1754944e-38, %v1112
        %v1114 = vsel %vm1111, %v1113, %v1109
        %v1115 = vmul.f32 %v1090, %v1114
        %v1116 = vmin.f32 %v1115, 1.0
        %v1117 = vmax.f32 %v1116, -1.0
        %v1118 = vmul.f32 %v556, %v556
        %v1119 = vmin.f32 16.0, %v1118
        %v1120 = vmul.f32 %v1119, 2.1237322e-06
        %v1121 = vadd.f32 %v1120, 0.00028619796
        %v1122 = vmul.f32 %v1119, %v1121
        %v1123 = vadd.f32 %v1122, 0.0036580483
        %v1124 = vmul.f32 %v1119, %v1123
        %v1125 = vadd.f32 %v1124, 0.05243302
        %v1126 = vmul.f32 %v1119, %v1125
        %v1127 = vadd.f32 %v1126, 0.18741608
        %v1128 = vmul.f32 %v1119, %v1127
        %v1129 = vadd.f32 %v1128, 1.1283791
        %v1130 = vmul.f32 %v556, %v1129
        %v1131 = vmul.f32 %v1119, 3.8918573e-05
        %v1132 = vadd.f32 %v1131, 0.001143296
        %v1133 = vmul.f32 %v1119, %v1132
        %v1134 = vadd.f32 %v1133, 0.014752088
        %v1135 = vmul.f32 %v1119, %v1134
        %v1136 = vadd.f32 %v1135, 0.112945676
        %v1137 = vmul.f32 %v1119, %v1136
        %v1138 = vadd.f32 %v1137, 0.4994258
        %v1139 = vmul.f32 %v1119, %v1138
        %v1140 = vadd.f32 %v1139, 1.0
        %v1141 = vrcp.pop %v1140
        %v1142 = vmul.f32 %v1140, %v1141
        %v1143 = vsub.f32 1.0, %v1142
        %v1144 = vmul.f32 %v1141, %v1143
        %v1145 = vadd.f32 %v1141, %v1144
        %vm1146 = vweird.f32 %v1140
        %vm1147 = vweird.f32 %v1141
        %vm1148 = vmor %vm1146, %vm1147
        %v1149 = vsel %vm1148, %v1141, %v1145
        %v1150 = vand.u32 2147483647, %v1140
        %vm1151 = vcmp.eq.f32.partialorder %v1150, 8.507059e+37
        %v1152 = vand.u32 %v1140, 2147483648
        %v1153 = vor.u32 1.1754944e-38, %v1152
        %v1154 = vsel %vm1151, %v1153, %v1149
        %v1155 = vmul.f32 %v1130, %v1154
        %v1156 = vmin.f32 %v1155, 1.0
        %v1157 = vmax.f32 %v1156, -1.0
        %v1158 = vmul.f32 %v557, %v557
        %v1159 = vmin.f32 16.0, %v1158
        %v1160 = vmul.f32 %v1159, 2.1237322e-06
        %v1161 = vadd.f32 %v1160, 0.00028619796
        %v1162 = vmul.f32 %v1159, %v1161
        %v1163 = vadd.f32 %v1162, 0.0036580483
        %v1164 = vmul.f32 %v1159, %v1163
        %v1165 = vadd.f32 %v1164, 0.05243302
        %v1166 = vmul.f32 %v1159, %v1165
        %v1167 = vadd.f32 %v1166, 0.18741608
        %v1168 = vmul.f32 %v1159, %v1167
        %v1169 = vadd.f32 %v1168, 1.1283791
        %v1170 = vmul.f32 %v557, %v1169
        %v1171 = vmul.f32 %v1159, 3.8918573e-05
        %v1172 = vadd.f32 %v1171, 0.001143296
        %v1173 = vmul.f32 %v1159, %v1172
        %v1174 = vadd.f32 %v1173, 0.014752088
        %v1175 = vmul.f32 %v1159, %v1174
        %v1176 = vadd.f32 %v1175, 0.112945676
        %v1177 = vmul.f32 %v1159, %v1176
        %v1178 = vadd.f32 %v1177, 0.4994258
        %v1179 = vmul.f32 %v1159, %v1178
        %v1180 = vadd.f32 %v1179, 1.0
        %v1181 = vrcp.pop %v1180
        %v1182 = vmul.f32 %v1180, %v1181
        %v1183 = vsub.f32 1.0, %v1182
        %v1184 = vmul.f32 %v1181, %v1183
        %v1185 = vadd.f32 %v1181, %v1184
        %vm1186 = vweird.f32 %v1180
        %vm1187 = vweird.f32 %v1181
        %vm1188 = vmor %vm1186, %vm1187
        %v1189 = vsel %vm1188, %v1181, %v1185
        %v1190 = vand.u32 2147483647, %v1180
        %vm1191 = vcmp.eq.f32.partialorder %v1190, 8.507059e+37
        %v1192 = vand.u32 %v1180, 2147483648
        %v1193 = vor.u32 1.1754944e-38, %v1192
        %v1194 = vsel %vm1191, %v1193, %v1189
        %v1195 = vmul.f32 %v1170, %v1194
        %v1196 = vmin.f32 %v1195, 1.0
        %v1197 = vmax.f32 %v1196, -1.0
        %v1198 = vadd.f32 %v597, 1.0
        %v1199 = vadd.f32 %v637, 1.0
        %v1200 = vadd.f32 %v677, 1.0
        %v1201 = vadd.f32 %v717, 1.0
        %v1202 = vadd.f32 %v757, 1.0
        %v1203 = vadd.f32 %v797, 1.0
        %v1204 = vadd.f32 %v837, 1.0
        %v1205 = vadd.f32 %v877, 1.0
        %v1206 = vadd.f32 %v917, 1.0
        %v1207 = vadd.f32 %v957, 1.0
        %v1208 = vadd.f32 %v997, 1.0
        %v1209 = vadd.f32 %v1037, 1.0
        %v1210 = vadd.f32 %v1077, 1.0
        %v1211 = vadd.f32 %v1117, 1.0
        %v1212 = vadd.f32 %v1157, 1.0
        %v1213 = vadd.f32 %v1197, 1.0
        %v1214 = vmul.f32 %v526, %v1198
        %v1215 = vmul.f32 %v527, %v1199
        %v1216 = vmul.f32 %v528, %v1200
        %v1217 = vmul.f32 %v529, %v1201
        %v1218 = vmul.f32 %v530, %v1202
        %v1219 = vmul.f32 %v531, %v1203
        %v1220 = vmul.f32 %v532, %v1204
        %v1221 = vmul.f32 %v533, %v1205
        %v1222 = vmul.f32 %v534, %v1206
        %v1223 = vmul.f32 %v535, %v1207
        %v1224 = vmul.f32 %v536, %v1208
        %v1225 = vmul.f32 %v537, %v1209
        %v1226 = vmul.f32 %v538, %v1210
        %v1227 = vmul.f32 %v539, %v1211
        %v1228 = vmul.f32 %v540, %v1212
        %v1229 = vmul.f32 %v541, %v1213
        %v1230 = vld [vmem:[#allocation11] sm:$0xff]
        %v1231 = vld [vmem:[#allocation11 + $0x8] sm:$0xff]
        %v1232 = vld [vmem:[#allocation11 + $0x10] sm:$0xff]
        %v1233 = vld [vmem:[#allocation11 + $0x18] sm:$0xff]
        %v1234 = vld [vmem:[#allocation11 + $0x20] sm:$0xff]
        %v1235 = vld [vmem:[#allocation11 + $0x28] sm:$0xff]
        %v1236 = vld [vmem:[#allocation11 + $0x30] sm:$0xff]
        %v1237 = vld [vmem:[#allocation11 + $0x38] sm:$0xff]
        %v1238 = vld [vmem:[#allocation11 + $0x40] sm:$0xff]
        %v1239 = vld [vmem:[#allocation11 + $0x48] sm:$0xff]
        %v1240 = vld [vmem:[#allocation11 + $0x50] sm:$0xff]
        %v1241 = vld [vmem:[#allocation11 + $0x58] sm:$0xff]
        %v1242 = vld [vmem:[#allocation11 + $0x60] sm:$0xff]
        %v1243 = vld [vmem:[#allocation11 + $0x68] sm:$0xff]
        %v1244 = vld [vmem:[#allocation11 + $0x70] sm:$0xff]
        %v1245 = vld [vmem:[#allocation11 + $0x78] sm:$0xff]
        %v1246 = vld [vmem:[%s6] sm:$0x1]
        %v1248 = vperm.slane %v1246, 0
        %1250 = vmatpush.msra.mxu0 %v1245
        %1251 = vmatpush.msra.mxu0 %v1244
        %1252 = vmatpush.msra.mxu0 %v1243
        %1253 = vmatpush.msra.mxu0 %v1242
        %1254 = vmatpush.msra.mxu0 %v1241
        %1255 = vmatpush.msra.mxu0 %v1240
        %1256 = vmatpush.msra.mxu0 %v1239
        %1257 = vmatpush.msra.mxu0 %v1238
        %1258 = vmatpush.msra.mxu0 %v1237
        %1259 = vmatpush.msra.mxu0 %v1236
        %1260 = vmatpush.msra.mxu0 %v1235
        %1261 = vmatpush.msra.mxu0 %v1234
        %1262 = vmatpush.msra.mxu0 %v1233
        %1263 = vmatpush.msra.mxu0 %v1232
        %1264 = vmatpush.msra.mxu0 %v1231
        %1265 = vmatpush.msra.mxu0 %v1230
        %1266 = vmatmul.f32.gmra.mxu0 %v1214
        %v1267 = vpop.f32.mrf.mxu0
        %v1268 = vadd.f32 %v1248, %v1267
        %1269 = vmatmul.f32.gmra.mxu0 %v1215
        %v1270 = vpop.f32.mrf.mxu0
        %v1271 = vadd.f32 %v1248, %v1270
        %1272 = vmatmul.f32.gmra.mxu0 %v1216
        %v1273 = vpop.f32.mrf.mxu0
        %v1274 = vadd.f32 %v1248, %v1273
        %1275 = vmatmul.f32.gmra.mxu0 %v1217
        %v1276 = vpop.f32.mrf.mxu0
        %v1277 = vadd.f32 %v1248, %v1276
        %1278 = vmatmul.f32.gmra.mxu0 %v1218
        %v1279 = vpop.f32.mrf.mxu0
        %v1280 = vadd.f32 %v1248, %v1279
        %1281 = vmatmul.f32.gmra.mxu0 %v1219
        %v1282 = vpop.f32.mrf.mxu0
        %v1283 = vadd.f32 %v1248, %v1282
        %1284 = vmatmul.f32.gmra.mxu0 %v1220
        %v1285 = vpop.f32.mrf.mxu0
        %v1286 = vadd.f32 %v1248, %v1285
        %1287 = vmatmul.f32.gmra.mxu0 %v1221
        %v1288 = vpop.f32.mrf.mxu0
        %v1289 = vadd.f32 %v1248, %v1288
        %1290 = vmatmul.f32.gmra.mxu0 %v1222
        %v1291 = vpop.f32.mrf.mxu0
        %v1292 = vadd.f32 %v1248, %v1291
        %1293 = vmatmul.f32.gmra.mxu0 %v1223
        %v1294 = vpop.f32.mrf.mxu0
        %v1295 = vadd.f32 %v1248, %v1294
        %1296 = vmatmul.f32.gmra.mxu0 %v1224
        %v1297 = vpop.f32.mrf.mxu0
        %v1298 = vadd.f32 %v1248, %v1297
        %1299 = vmatmul.f32.gmra.mxu0 %v1225
        %v1300 = vpop.f32.mrf.mxu0
        %v1301 = vadd.f32 %v1248, %v1300
        %1302 = vmatmul.f32.gmra.mxu0 %v1226
        %v1303 = vpop.f32.mrf.mxu0
        %v1304 = vadd.f32 %v1248, %v1303
        %1305 = vmatmul.f32.gmra.mxu0 %v1227
        %v1306 = vpop.f32.mrf.mxu0
        %v1307 = vadd.f32 %v1248, %v1306
        %1308 = vmatmul.f32.gmra.mxu0 %v1228
        %v1309 = vpop.f32.mrf.mxu0
        %v1310 = vadd.f32 %v1248, %v1309
        %1311 = vmatmul.f32.gmra.mxu0 %v1229
        %v1312 = vpop.f32.mrf.mxu0
        %v1313 = vadd.f32 %v1248, %v1312
        %1314 = vdwg.mxu0
        %v1315 = vmul.f32 %v1268, 0.5
        %v1316 = vmul.f32 %v1271, 0.5
        %v1317 = vmul.f32 %v1274, 0.5
        %v1318 = vmul.f32 %v1277, 0.5
        %v1319 = vmul.f32 %v1280, 0.5
        %v1320 = vmul.f32 %v1283, 0.5
        %v1321 = vmul.f32 %v1286, 0.5
        %v1322 = vmul.f32 %v1289, 0.5
        %v1323 = vmul.f32 %v1292, 0.5
        %v1324 = vmul.f32 %v1295, 0.5
        %v1325 = vmul.f32 %v1298, 0.5
        %v1326 = vmul.f32 %v1301, 0.5
        %v1327 = vmul.f32 %v1304, 0.5
        %v1328 = vmul.f32 %v1307, 0.5
        %v1329 = vmul.f32 %v1310, 0.5
        %v1330 = vmul.f32 %v1313, 0.5
        %v1331 = vmul.f32 %v1268, 0.70710677
        %v1332 = vmul.f32 %v1271, 0.70710677
        %v1333 = vmul.f32 %v1274, 0.70710677
        %v1334 = vmul.f32 %v1277, 0.70710677
        %v1335 = vmul.f32 %v1280, 0.70710677
        %v1336 = vmul.f32 %v1283, 0.70710677
        %v1337 = vmul.f32 %v1286, 0.70710677
        %v1338 = vmul.f32 %v1289, 0.70710677
        %v1339 = vmul.f32 %v1292, 0.70710677
        %v1340 = vmul.f32 %v1295, 0.70710677
        %v1341 = vmul.f32 %v1298, 0.70710677
        %v1342 = vmul.f32 %v1301, 0.70710677
        %v1343 = vmul.f32 %v1304, 0.70710677
        %v1344 = vmul.f32 %v1307, 0.70710677
        %v1345 = vmul.f32 %v1310, 0.70710677
        %v1346 = vmul.f32 %v1313, 0.70710677
        %v1347 = vmul.f32 %v1331, %v1331
        %v1348 = vmin.f32 16.0, %v1347
        %v1349 = vmul.f32 %v1348, 2.1237322e-06
        %v1350 = vadd.f32 %v1349, 0.00028619796
        %v1351 = vmul.f32 %v1348, %v1350
        %v1352 = vadd.f32 %v1351, 0.0036580483
        %v1353 = vmul.f32 %v1348, %v1352
        %v1354 = vadd.f32 %v1353, 0.05243302
        %v1355 = vmul.f32 %v1348, %v1354
        %v1356 = vadd.f32 %v1355, 0.18741608
        %v1357 = vmul.f32 %v1348, %v1356
        %v1358 = vadd.f32 %v1357, 1.1283791
        %v1359 = vmul.f32 %v1331, %v1358
        %v1360 = vmul.f32 %v1348, 3.8918573e-05
        %v1361 = vadd.f32 %v1360, 0.001143296
        %v1362 = vmul.f32 %v1348, %v1361
        %v1363 = vadd.f32 %v1362, 0.014752088
        %v1364 = vmul.f32 %v1348, %v1363
        %v1365 = vadd.f32 %v1364, 0.112945676
        %v1366 = vmul.f32 %v1348, %v1365
        %v1367 = vadd.f32 %v1366, 0.4994258
        %v1368 = vmul.f32 %v1348, %v1367
        %v1369 = vadd.f32 %v1368, 1.0
        %v1370 = vrcp.pop %v1369
        %v1371 = vmul.f32 %v1369, %v1370
        %v1372 = vsub.f32 1.0, %v1371
        %v1373 = vmul.f32 %v1370, %v1372
        %v1374 = vadd.f32 %v1370, %v1373
        %vm1375 = vweird.f32 %v1369
        %vm1376 = vweird.f32 %v1370
        %vm1377 = vmor %vm1375, %vm1376
        %v1378 = vsel %vm1377, %v1370, %v1374
        %v1379 = vand.u32 2147483647, %v1369
        %vm1380 = vcmp.eq.f32.partialorder %v1379, 8.507059e+37
        %v1381 = vand.u32 %v1369, 2147483648
        %v1382 = vor.u32 1.1754944e-38, %v1381
        %v1383 = vsel %vm1380, %v1382, %v1378
        %v1384 = vmul.f32 %v1359, %v1383
        %v1385 = vmin.f32 %v1384, 1.0
        %v1386 = vmax.f32 %v1385, -1.0
        %v1387 = vmul.f32 %v1332, %v1332
        %v1388 = vmin.f32 16.0, %v1387
        %v1389 = vmul.f32 %v1388, 2.1237322e-06
        %v1390 = vadd.f32 %v1389, 0.00028619796
        %v1391 = vmul.f32 %v1388, %v1390
        %v1392 = vadd.f32 %v1391, 0.0036580483
        %v1393 = vmul.f32 %v1388, %v1392
        %v1394 = vadd.f32 %v1393, 0.05243302
        %v1395 = vmul.f32 %v1388, %v1394
        %v1396 = vadd.f32 %v1395, 0.18741608
        %v1397 = vmul.f32 %v1388, %v1396
        %v1398 = vadd.f32 %v1397, 1.1283791
        %v1399 = vmul.f32 %v1332, %v1398
        %v1400 = vmul.f32 %v1388, 3.8918573e-05
        %v1401 = vadd.f32 %v1400, 0.001143296
        %v1402 = vmul.f32 %v1388, %v1401
        %v1403 = vadd.f32 %v1402, 0.014752088
        %v1404 = vmul.f32 %v1388, %v1403
        %v1405 = vadd.f32 %v1404, 0.112945676
        %v1406 = vmul.f32 %v1388, %v1405
        %v1407 = vadd.f32 %v1406, 0.4994258
        %v1408 = vmul.f32 %v1388, %v1407
        %v1409 = vadd.f32 %v1408, 1.0
        %v1410 = vrcp.pop %v1409
        %v1411 = vmul.f32 %v1409, %v1410
        %v1412 = vsub.f32 1.0, %v1411
        %v1413 = vmul.f32 %v1410, %v1412
        %v1414 = vadd.f32 %v1410, %v1413
        %vm1415 = vweird.f32 %v1409
        %vm1416 = vweird.f32 %v1410
        %vm1417 = vmor %vm1415, %vm1416
        %v1418 = vsel %vm1417, %v1410, %v1414
        %v1419 = vand.u32 2147483647, %v1409
        %vm1420 = vcmp.eq.f32.partialorder %v1419, 8.507059e+37
        %v1421 = vand.u32 %v1409, 2147483648
        %v1422 = vor.u32 1.1754944e-38, %v1421
        %v1423 = vsel %vm1420, %v1422, %v1418
        %v1424 = vmul.f32 %v1399, %v1423
        %v1425 = vmin.f32 %v1424, 1.0
        %v1426 = vmax.f32 %v1425, -1.0
        %v1427 = vmul.f32 %v1333, %v1333
        %v1428 = vmin.f32 16.0, %v1427
        %v1429 = vmul.f32 %v1428, 2.1237322e-06
        %v1430 = vadd.f32 %v1429, 0.00028619796
        %v1431 = vmul.f32 %v1428, %v1430
        %v1432 = vadd.f32 %v1431, 0.0036580483
        %v1433 = vmul.f32 %v1428, %v1432
        %v1434 = vadd.f32 %v1433, 0.05243302
        %v1435 = vmul.f32 %v1428, %v1434
        %v1436 = vadd.f32 %v1435, 0.18741608
        %v1437 = vmul.f32 %v1428, %v1436
        %v1438 = vadd.f32 %v1437, 1.1283791
        %v1439 = vmul.f32 %v1333, %v1438
        %v1440 = vmul.f32 %v1428, 3.8918573e-05
        %v1441 = vadd.f32 %v1440, 0.001143296
        %v1442 = vmul.f32 %v1428, %v1441
        %v1443 = vadd.f32 %v1442, 0.014752088
        %v1444 = vmul.f32 %v1428, %v1443
        %v1445 = vadd.f32 %v1444, 0.112945676
        %v1446 = vmul.f32 %v1428, %v1445
        %v1447 = vadd.f32 %v1446, 0.4994258
        %v1448 = vmul.f32 %v1428, %v1447
        %v1449 = vadd.f32 %v1448, 1.0
        %v1450 = vrcp.pop %v1449
        %v1451 = vmul.f32 %v1449, %v1450
        %v1452 = vsub.f32 1.0, %v1451
        %v1453 = vmul.f32 %v1450, %v1452
        %v1454 = vadd.f32 %v1450, %v1453
        %vm1455 = vweird.f32 %v1449
        %vm1456 = vweird.f32 %v1450
        %vm1457 = vmor %vm1455, %vm1456
        %v1458 = vsel %vm1457, %v1450, %v1454
        %v1459 = vand.u32 2147483647, %v1449
        %vm1460 = vcmp.eq.f32.partialorder %v1459, 8.507059e+37
        %v1461 = vand.u32 %v1449, 2147483648
        %v1462 = vor.u32 1.1754944e-38, %v1461
        %v1463 = vsel %vm1460, %v1462, %v1458
        %v1464 = vmul.f32 %v1439, %v1463
        %v1465 = vmin.f32 %v1464, 1.0
        %v1466 = vmax.f32 %v1465, -1.0
        %v1467 = vmul.f32 %v1334, %v1334
        %v1468 = vmin.f32 16.0, %v1467
        %v1469 = vmul.f32 %v1468, 2.1237322e-06
        %v1470 = vadd.f32 %v1469, 0.00028619796
        %v1471 = vmul.f32 %v1468, %v1470
        %v1472 = vadd.f32 %v1471, 0.0036580483
        %v1473 = vmul.f32 %v1468, %v1472
        %v1474 = vadd.f32 %v1473, 0.05243302
        %v1475 = vmul.f32 %v1468, %v1474
        %v1476 = vadd.f32 %v1475, 0.18741608
        %v1477 = vmul.f32 %v1468, %v1476
        %v1478 = vadd.f32 %v1477, 1.1283791
        %v1479 = vmul.f32 %v1334, %v1478
        %v1480 = vmul.f32 %v1468, 3.8918573e-05
        %v1481 = vadd.f32 %v1480, 0.001143296
        %v1482 = vmul.f32 %v1468, %v1481
        %v1483 = vadd.f32 %v1482, 0.014752088
        %v1484 = vmul.f32 %v1468, %v1483
        %v1485 = vadd.f32 %v1484, 0.112945676
        %v1486 = vmul.f32 %v1468, %v1485
        %v1487 = vadd.f32 %v1486, 0.4994258
        %v1488 = vmul.f32 %v1468, %v1487
        %v1489 = vadd.f32 %v1488, 1.0
        %v1490 = vrcp.pop %v1489
        %v1491 = vmul.f32 %v1489, %v1490
        %v1492 = vsub.f32 1.0, %v1491
        %v1493 = vmul.f32 %v1490, %v1492
        %v1494 = vadd.f32 %v1490, %v1493
        %vm1495 = vweird.f32 %v1489
        %vm1496 = vweird.f32 %v1490
        %vm1497 = vmor %vm1495, %vm1496
        %v1498 = vsel %vm1497, %v1490, %v1494
        %v1499 = vand.u32 2147483647, %v1489
        %vm1500 = vcmp.eq.f32.partialorder %v1499, 8.507059e+37
        %v1501 = vand.u32 %v1489, 2147483648
        %v1502 = vor.u32 1.1754944e-38, %v1501
        %v1503 = vsel %vm1500, %v1502, %v1498
        %v1504 = vmul.f32 %v1479, %v1503
        %v1505 = vmin.f32 %v1504, 1.0
        %v1506 = vmax.f32 %v1505, -1.0
        %v1507 = vmul.f32 %v1335, %v1335
        %v1508 = vmin.f32 16.0, %v1507
        %v1509 = vmul.f32 %v1508, 2.1237322e-06
        %v1510 = vadd.f32 %v1509, 0.00028619796
        %v1511 = vmul.f32 %v1508, %v1510
        %v1512 = vadd.f32 %v1511, 0.0036580483
        %v1513 = vmul.f32 %v1508, %v1512
        %v1514 = vadd.f32 %v1513, 0.05243302
        %v1515 = vmul.f32 %v1508, %v1514
        %v1516 = vadd.f32 %v1515, 0.18741608
        %v1517 = vmul.f32 %v1508, %v1516
        %v1518 = vadd.f32 %v1517, 1.1283791
        %v1519 = vmul.f32 %v1335, %v1518
        %v1520 = vmul.f32 %v1508, 3.8918573e-05
        %v1521 = vadd.f32 %v1520, 0.001143296
        %v1522 = vmul.f32 %v1508, %v1521
        %v1523 = vadd.f32 %v1522, 0.014752088
        %v1524 = vmul.f32 %v1508, %v1523
        %v1525 = vadd.f32 %v1524, 0.112945676
        %v1526 = vmul.f32 %v1508, %v1525
        %v1527 = vadd.f32 %v1526, 0.4994258
        %v1528 = vmul.f32 %v1508, %v1527
        %v1529 = vadd.f32 %v1528, 1.0
        %v1530 = vrcp.pop %v1529
        %v1531 = vmul.f32 %v1529, %v1530
        %v1532 = vsub.f32 1.0, %v1531
        %v1533 = vmul.f32 %v1530, %v1532
        %v1534 = vadd.f32 %v1530, %v1533
        %vm1535 = vweird.f32 %v1529
        %vm1536 = vweird.f32 %v1530
        %vm1537 = vmor %vm1535, %vm1536
        %v1538 = vsel %vm1537, %v1530, %v1534
        %v1539 = vand.u32 2147483647, %v1529
        %vm1540 = vcmp.eq.f32.partialorder %v1539, 8.507059e+37
        %v1541 = vand.u32 %v1529, 2147483648
        %v1542 = vor.u32 1.1754944e-38, %v1541
        %v1543 = vsel %vm1540, %v1542, %v1538
        %v1544 = vmul.f32 %v1519, %v1543
        %v1545 = vmin.f32 %v1544, 1.0
        %v1546 = vmax.f32 %v1545, -1.0
        %v1547 = vmul.f32 %v1336, %v1336
        %v1548 = vmin.f32 16.0, %v1547
        %v1549 = vmul.f32 %v1548, 2.1237322e-06
        %v1550 = vadd.f32 %v1549, 0.00028619796
        %v1551 = vmul.f32 %v1548, %v1550
        %v1552 = vadd.f32 %v1551, 0.0036580483
        %v1553 = vmul.f32 %v1548, %v1552
        %v1554 = vadd.f32 %v1553, 0.05243302
        %v1555 = vmul.f32 %v1548, %v1554
        %v1556 = vadd.f32 %v1555, 0.18741608
        %v1557 = vmul.f32 %v1548, %v1556
        %v1558 = vadd.f32 %v1557, 1.1283791
        %v1559 = vmul.f32 %v1336, %v1558
        %v1560 = vmul.f32 %v1548, 3.8918573e-05
        %v1561 = vadd.f32 %v1560, 0.001143296
        %v1562 = vmul.f32 %v1548, %v1561
        %v1563 = vadd.f32 %v1562, 0.014752088
        %v1564 = vmul.f32 %v1548, %v1563
        %v1565 = vadd.f32 %v1564, 0.112945676
        %v1566 = vmul.f32 %v1548, %v1565
        %v1567 = vadd.f32 %v1566, 0.4994258
        %v1568 = vmul.f32 %v1548, %v1567
        %v1569 = vadd.f32 %v1568, 1.0
        %v1570 = vrcp.pop %v1569
        %v1571 = vmul.f32 %v1569, %v1570
        %v1572 = vsub.f32 1.0, %v1571
        %v1573 = vmul.f32 %v1570, %v1572
        %v1574 = vadd.f32 %v1570, %v1573
        %vm1575 = vweird.f32 %v1569
        %vm1576 = vweird.f32 %v1570
        %vm1577 = vmor %vm1575, %vm1576
        %v1578 = vsel %vm1577, %v1570, %v1574
        %v1579 = vand.u32 2147483647, %v1569
        %vm1580 = vcmp.eq.f32.partialorder %v1579, 8.507059e+37
        %v1581 = vand.u32 %v1569, 2147483648
        %v1582 = vor.u32 1.1754944e-38, %v1581
        %v1583 = vsel %vm1580, %v1582, %v1578
        %v1584 = vmul.f32 %v1559, %v1583
        %v1585 = vmin.f32 %v1584, 1.0
        %v1586 = vmax.f32 %v1585, -1.0
        %v1587 = vmul.f32 %v1337, %v1337
        %v1588 = vmin.f32 16.0, %v1587
        %v1589 = vmul.f32 %v1588, 2.1237322e-06
        %v1590 = vadd.f32 %v1589, 0.00028619796
        %v1591 = vmul.f32 %v1588, %v1590
        %v1592 = vadd.f32 %v1591, 0.0036580483
        %v1593 = vmul.f32 %v1588, %v1592
        %v1594 = vadd.f32 %v1593, 0.05243302
        %v1595 = vmul.f32 %v1588, %v1594
        %v1596 = vadd.f32 %v1595, 0.18741608
        %v1597 = vmul.f32 %v1588, %v1596
        %v1598 = vadd.f32 %v1597, 1.1283791
        %v1599 = vmul.f32 %v1337, %v1598
        %v1600 = vmul.f32 %v1588, 3.8918573e-05
        %v1601 = vadd.f32 %v1600, 0.001143296
        %v1602 = vmul.f32 %v1588, %v1601
        %v1603 = vadd.f32 %v1602, 0.014752088
        %v1604 = vmul.f32 %v1588, %v1603
        %v1605 = vadd.f32 %v1604, 0.112945676
        %v1606 = vmul.f32 %v1588, %v1605
        %v1607 = vadd.f32 %v1606, 0.4994258
        %v1608 = vmul.f32 %v1588, %v1607
        %v1609 = vadd.f32 %v1608, 1.0
        %v1610 = vrcp.pop %v1609
        %v1611 = vmul.f32 %v1609, %v1610
        %v1612 = vsub.f32 1.0, %v1611
        %v1613 = vmul.f32 %v1610, %v1612
        %v1614 = vadd.f32 %v1610, %v1613
        %vm1615 = vweird.f32 %v1609
        %vm1616 = vweird.f32 %v1610
        %vm1617 = vmor %vm1615, %vm1616
        %v1618 = vsel %vm1617, %v1610, %v1614
        %v1619 = vand.u32 2147483647, %v1609
        %vm1620 = vcmp.eq.f32.partialorder %v1619, 8.507059e+37
        %v1621 = vand.u32 %v1609, 2147483648
        %v1622 = vor.u32 1.1754944e-38, %v1621
        %v1623 = vsel %vm1620, %v1622, %v1618
        %v1624 = vmul.f32 %v1599, %v1623
        %v1625 = vmin.f32 %v1624, 1.0
        %v1626 = vmax.f32 %v1625, -1.0
        %v1627 = vmul.f32 %v1338, %v1338
        %v1628 = vmin.f32 16.0, %v1627
        %v1629 = vmul.f32 %v1628, 2.1237322e-06
        %v1630 = vadd.f32 %v1629, 0.00028619796
        %v1631 = vmul.f32 %v1628, %v1630
        %v1632 = vadd.f32 %v1631, 0.0036580483
        %v1633 = vmul.f32 %v1628, %v1632
        %v1634 = vadd.f32 %v1633, 0.05243302
        %v1635 = vmul.f32 %v1628, %v1634
        %v1636 = vadd.f32 %v1635, 0.18741608
        %v1637 = vmul.f32 %v1628, %v1636
        %v1638 = vadd.f32 %v1637, 1.1283791
        %v1639 = vmul.f32 %v1338, %v1638
        %v1640 = vmul.f32 %v1628, 3.8918573e-05
        %v1641 = vadd.f32 %v1640, 0.001143296
        %v1642 = vmul.f32 %v1628, %v1641
        %v1643 = vadd.f32 %v1642, 0.014752088
        %v1644 = vmul.f32 %v1628, %v1643
        %v1645 = vadd.f32 %v1644, 0.112945676
        %v1646 = vmul.f32 %v1628, %v1645
        %v1647 = vadd.f32 %v1646, 0.4994258
        %v1648 = vmul.f32 %v1628, %v1647
        %v1649 = vadd.f32 %v1648, 1.0
        %v1650 = vrcp.pop %v1649
        %v1651 = vmul.f32 %v1649, %v1650
        %v1652 = vsub.f32 1.0, %v1651
        %v1653 = vmul.f32 %v1650, %v1652
        %v1654 = vadd.f32 %v1650, %v1653
        %vm1655 = vweird.f32 %v1649
        %vm1656 = vweird.f32 %v1650
        %vm1657 = vmor %vm1655, %vm1656
        %v1658 = vsel %vm1657, %v1650, %v1654
        %v1659 = vand.u32 2147483647, %v1649
        %vm1660 = vcmp.eq.f32.partialorder %v1659, 8.507059e+37
        %v1661 = vand.u32 %v1649, 2147483648
        %v1662 = vor.u32 1.1754944e-38, %v1661
        %v1663 = vsel %vm1660, %v1662, %v1658
        %v1664 = vmul.f32 %v1639, %v1663
        %v1665 = vmin.f32 %v1664, 1.0
        %v1666 = vmax.f32 %v1665, -1.0
        %v1667 = vmul.f32 %v1339, %v1339
        %v1668 = vmin.f32 16.0, %v1667
        %v1669 = vmul.f32 %v1668, 2.1237322e-06
        %v1670 = vadd.f32 %v1669, 0.00028619796
        %v1671 = vmul.f32 %v1668, %v1670
        %v1672 = vadd.f32 %v1671, 0.0036580483
        %v1673 = vmul.f32 %v1668, %v1672
        %v1674 = vadd.f32 %v1673, 0.05243302
        %v1675 = vmul.f32 %v1668, %v1674
        %v1676 = vadd.f32 %v1675, 0.18741608
        %v1677 = vmul.f32 %v1668, %v1676
        %v1678 = vadd.f32 %v1677, 1.1283791
        %v1679 = vmul.f32 %v1339, %v1678
        %v1680 = vmul.f32 %v1668, 3.8918573e-05
        %v1681 = vadd.f32 %v1680, 0.001143296
        %v1682 = vmul.f32 %v1668, %v1681
        %v1683 = vadd.f32 %v1682, 0.014752088
        %v1684 = vmul.f32 %v1668, %v1683
        %v1685 = vadd.f32 %v1684, 0.112945676
        %v1686 = vmul.f32 %v1668, %v1685
        %v1687 = vadd.f32 %v1686, 0.4994258
        %v1688 = vmul.f32 %v1668, %v1687
        %v1689 = vadd.f32 %v1688, 1.0
        %v1690 = vrcp.pop %v1689
        %v1691 = vmul.f32 %v1689, %v1690
        %v1692 = vsub.f32 1.0, %v1691
        %v1693 = vmul.f32 %v1690, %v1692
        %v1694 = vadd.f32 %v1690, %v1693
        %vm1695 = vweird.f32 %v1689
        %vm1696 = vweird.f32 %v1690
        %vm1697 = vmor %vm1695, %vm1696
        %v1698 = vsel %vm1697, %v1690, %v1694
        %v1699 = vand.u32 2147483647, %v1689
        %vm1700 = vcmp.eq.f32.partialorder %v1699, 8.507059e+37
        %v1701 = vand.u32 %v1689, 2147483648
        %v1702 = vor.u32 1.1754944e-38, %v1701
        %v1703 = vsel %vm1700, %v1702, %v1698
        %v1704 = vmul.f32 %v1679, %v1703
        %v1705 = vmin.f32 %v1704, 1.0
        %v1706 = vmax.f32 %v1705, -1.0
        %v1707 = vmul.f32 %v1340, %v1340
        %v1708 = vmin.f32 16.0, %v1707
        %v1709 = vmul.f32 %v1708, 2.1237322e-06
        %v1710 = vadd.f32 %v1709, 0.00028619796
        %v1711 = vmul.f32 %v1708, %v1710
        %v1712 = vadd.f32 %v1711, 0.0036580483
        %v1713 = vmul.f32 %v1708, %v1712
        %v1714 = vadd.f32 %v1713, 0.05243302
        %v1715 = vmul.f32 %v1708, %v1714
        %v1716 = vadd.f32 %v1715, 0.18741608
        %v1717 = vmul.f32 %v1708, %v1716
        %v1718 = vadd.f32 %v1717, 1.1283791
        %v1719 = vmul.f32 %v1340, %v1718
        %v1720 = vmul.f32 %v1708, 3.8918573e-05
        %v1721 = vadd.f32 %v1720, 0.001143296
        %v1722 = vmul.f32 %v1708, %v1721
        %v1723 = vadd.f32 %v1722, 0.014752088
        %v1724 = vmul.f32 %v1708, %v1723
        %v1725 = vadd.f32 %v1724, 0.112945676
        %v1726 = vmul.f32 %v1708, %v1725
        %v1727 = vadd.f32 %v1726, 0.4994258
        %v1728 = vmul.f32 %v1708, %v1727
        %v1729 = vadd.f32 %v1728, 1.0
        %v1730 = vrcp.pop %v1729
        %v1731 = vmul.f32 %v1729, %v1730
        %v1732 = vsub.f32 1.0, %v1731
        %v1733 = vmul.f32 %v1730, %v1732
        %v1734 = vadd.f32 %v1730, %v1733
        %vm1735 = vweird.f32 %v1729
        %vm1736 = vweird.f32 %v1730
        %vm1737 = vmor %vm1735, %vm1736
        %v1738 = vsel %vm1737, %v1730, %v1734
        %v1739 = vand.u32 2147483647, %v1729
        %vm1740 = vcmp.eq.f32.partialorder %v1739, 8.507059e+37
        %v1741 = vand.u32 %v1729, 2147483648
        %v1742 = vor.u32 1.1754944e-38, %v1741
        %v1743 = vsel %vm1740, %v1742, %v1738
        %v1744 = vmul.f32 %v1719, %v1743
        %v1745 = vmin.f32 %v1744, 1.0
        %v1746 = vmax.f32 %v1745, -1.0
        %v1747 = vmul.f32 %v1341, %v1341
        %v1748 = vmin.f32 16.0, %v1747
        %v1749 = vmul.f32 %v1748, 2.1237322e-06
        %v1750 = vadd.f32 %v1749, 0.00028619796
        %v1751 = vmul.f32 %v1748, %v1750
        %v1752 = vadd.f32 %v1751, 0.0036580483
        %v1753 = vmul.f32 %v1748, %v1752
        %v1754 = vadd.f32 %v1753, 0.05243302
        %v1755 = vmul.f32 %v1748, %v1754
        %v1756 = vadd.f32 %v1755, 0.18741608
        %v1757 = vmul.f32 %v1748, %v1756
        %v1758 = vadd.f32 %v1757, 1.1283791
        %v1759 = vmul.f32 %v1341, %v1758
        %v1760 = vmul.f32 %v1748, 3.8918573e-05
        %v1761 = vadd.f32 %v1760, 0.001143296
        %v1762 = vmul.f32 %v1748, %v1761
        %v1763 = vadd.f32 %v1762, 0.014752088
        %v1764 = vmul.f32 %v1748, %v1763
        %v1765 = vadd.f32 %v1764, 0.112945676
        %v1766 = vmul.f32 %v1748, %v1765
        %v1767 = vadd.f32 %v1766, 0.4994258
        %v1768 = vmul.f32 %v1748, %v1767
        %v1769 = vadd.f32 %v1768, 1.0
        %v1770 = vrcp.pop %v1769
        %v1771 = vmul.f32 %v1769, %v1770
        %v1772 = vsub.f32 1.0, %v1771
        %v1773 = vmul.f32 %v1770, %v1772
        %v1774 = vadd.f32 %v1770, %v1773
        %vm1775 = vweird.f32 %v1769
        %vm1776 = vweird.f32 %v1770
        %vm1777 = vmor %vm1775, %vm1776
        %v1778 = vsel %vm1777, %v1770, %v1774
        %v1779 = vand.u32 2147483647, %v1769
        %vm1780 = vcmp.eq.f32.partialorder %v1779, 8.507059e+37
        %v1781 = vand.u32 %v1769, 2147483648
        %v1782 = vor.u32 1.1754944e-38, %v1781
        %v1783 = vsel %vm1780, %v1782, %v1778
        %v1784 = vmul.f32 %v1759, %v1783
        %v1785 = vmin.f32 %v1784, 1.0
        %v1786 = vmax.f32 %v1785, -1.0
        %v1787 = vmul.f32 %v1342, %v1342
        %v1788 = vmin.f32 16.0, %v1787
        %v1789 = vmul.f32 %v1788, 2.1237322e-06
        %v1790 = vadd.f32 %v1789, 0.00028619796
        %v1791 = vmul.f32 %v1788, %v1790
        %v1792 = vadd.f32 %v1791, 0.0036580483
        %v1793 = vmul.f32 %v1788, %v1792
        %v1794 = vadd.f32 %v1793, 0.05243302
        %v1795 = vmul.f32 %v1788, %v1794
        %v1796 = vadd.f32 %v1795, 0.18741608
        %v1797 = vmul.f32 %v1788, %v1796
        %v1798 = vadd.f32 %v1797, 1.1283791
        %v1799 = vmul.f32 %v1342, %v1798
        %v1800 = vmul.f32 %v1788, 3.8918573e-05
        %v1801 = vadd.f32 %v1800, 0.001143296
        %v1802 = vmul.f32 %v1788, %v1801
        %v1803 = vadd.f32 %v1802, 0.014752088
        %v1804 = vmul.f32 %v1788, %v1803
        %v1805 = vadd.f32 %v1804, 0.112945676
        %v1806 = vmul.f32 %v1788, %v1805
        %v1807 = vadd.f32 %v1806, 0.4994258
        %v1808 = vmul.f32 %v1788, %v1807
        %v1809 = vadd.f32 %v1808, 1.0
        %v1810 = vrcp.pop %v1809
        %v1811 = vmul.f32 %v1809, %v1810
        %v1812 = vsub.f32 1.0, %v1811
        %v1813 = vmul.f32 %v1810, %v1812
        %v1814 = vadd.f32 %v1810, %v1813
        %vm1815 = vweird.f32 %v1809
        %vm1816 = vweird.f32 %v1810
        %vm1817 = vmor %vm1815, %vm1816
        %v1818 = vsel %vm1817, %v1810, %v1814
        %v1819 = vand.u32 2147483647, %v1809
        %vm1820 = vcmp.eq.f32.partialorder %v1819, 8.507059e+37
        %v1821 = vand.u32 %v1809, 2147483648
        %v1822 = vor.u32 1.1754944e-38, %v1821
        %v1823 = vsel %vm1820, %v1822, %v1818
        %v1824 = vmul.f32 %v1799, %v1823
        %v1825 = vmin.f32 %v1824, 1.0
        %v1826 = vmax.f32 %v1825, -1.0
        %v1827 = vmul.f32 %v1343, %v1343
        %v1828 = vmin.f32 16.0, %v1827
        %v1829 = vmul.f32 %v1828, 2.1237322e-06
        %v1830 = vadd.f32 %v1829, 0.00028619796
        %v1831 = vmul.f32 %v1828, %v1830
        %v1832 = vadd.f32 %v1831, 0.0036580483
        %v1833 = vmul.f32 %v1828, %v1832
        %v1834 = vadd.f32 %v1833, 0.05243302
        %v1835 = vmul.f32 %v1828, %v1834
        %v1836 = vadd.f32 %v1835, 0.18741608
        %v1837 = vmul.f32 %v1828, %v1836
        %v1838 = vadd.f32 %v1837, 1.1283791
        %v1839 = vmul.f32 %v1343, %v1838
        %v1840 = vmul.f32 %v1828, 3.8918573e-05
        %v1841 = vadd.f32 %v1840, 0.001143296
        %v1842 = vmul.f32 %v1828, %v1841
        %v1843 = vadd.f32 %v1842, 0.014752088
        %v1844 = vmul.f32 %v1828, %v1843
        %v1845 = vadd.f32 %v1844, 0.112945676
        %v1846 = vmul.f32 %v1828, %v1845
        %v1847 = vadd.f32 %v1846, 0.4994258
        %v1848 = vmul.f32 %v1828, %v1847
        %v1849 = vadd.f32 %v1848, 1.0
        %v1850 = vrcp.pop %v1849
        %v1851 = vmul.f32 %v1849, %v1850
        %v1852 = vsub.f32 1.0, %v1851
        %v1853 = vmul.f32 %v1850, %v1852
        %v1854 = vadd.f32 %v1850, %v1853
        %vm1855 = vweird.f32 %v1849
        %vm1856 = vweird.f32 %v1850
        %vm1857 = vmor %vm1855, %vm1856
        %v1858 = vsel %vm1857, %v1850, %v1854
        %v1859 = vand.u32 2147483647, %v1849
        %vm1860 = vcmp.eq.f32.partialorder %v1859, 8.507059e+37
        %v1861 = vand.u32 %v1849, 2147483648
        %v1862 = vor.u32 1.1754944e-38, %v1861
        %v1863 = vsel %vm1860, %v1862, %v1858
        %v1864 = vmul.f32 %v1839, %v1863
        %v1865 = vmin.f32 %v1864, 1.0
        %v1866 = vmax.f32 %v1865, -1.0
        %v1867 = vmul.f32 %v1344, %v1344
        %v1868 = vmin.f32 16.0, %v1867
        %v1869 = vmul.f32 %v1868, 2.1237322e-06
        %v1870 = vadd.f32 %v1869, 0.00028619796
        %v1871 = vmul.f32 %v1868, %v1870
        %v1872 = vadd.f32 %v1871, 0.0036580483
        %v1873 = vmul.f32 %v1868, %v1872
        %v1874 = vadd.f32 %v1873, 0.05243302
        %v1875 = vmul.f32 %v1868, %v1874
        %v1876 = vadd.f32 %v1875, 0.18741608
        %v1877 = vmul.f32 %v1868, %v1876
        %v1878 = vadd.f32 %v1877, 1.1283791
        %v1879 = vmul.f32 %v1344, %v1878
        %v1880 = vmul.f32 %v1868, 3.8918573e-05
        %v1881 = vadd.f32 %v1880, 0.001143296
        %v1882 = vmul.f32 %v1868, %v1881
        %v1883 = vadd.f32 %v1882, 0.014752088
        %v1884 = vmul.f32 %v1868, %v1883
        %v1885 = vadd.f32 %v1884, 0.112945676
        %v1886 = vmul.f32 %v1868, %v1885
        %v1887 = vadd.f32 %v1886, 0.4994258
        %v1888 = vmul.f32 %v1868, %v1887
        %v1889 = vadd.f32 %v1888, 1.0
        %v1890 = vrcp.pop %v1889
        %v1891 = vmul.f32 %v1889, %v1890
        %v1892 = vsub.f32 1.0, %v1891
        %v1893 = vmul.f32 %v1890, %v1892
        %v1894 = vadd.f32 %v1890, %v1893
        %vm1895 = vweird.f32 %v1889
        %vm1896 = vweird.f32 %v1890
        %vm1897 = vmor %vm1895, %vm1896
        %v1898 = vsel %vm1897, %v1890, %v1894
        %v1899 = vand.u32 2147483647, %v1889
        %vm1900 = vcmp.eq.f32.partialorder %v1899, 8.507059e+37
        %v1901 = vand.u32 %v1889, 2147483648
        %v1902 = vor.u32 1.1754944e-38, %v1901
        %v1903 = vsel %vm1900, %v1902, %v1898
        %v1904 = vmul.f32 %v1879, %v1903
        %v1905 = vmin.f32 %v1904, 1.0
        %v1906 = vmax.f32 %v1905, -1.0
        %v1907 = vmul.f32 %v1345, %v1345
        %v1908 = vmin.f32 16.0, %v1907
        %v1909 = vmul.f32 %v1908, 2.1237322e-06
        %v1910 = vadd.f32 %v1909, 0.00028619796
        %v1911 = vmul.f32 %v1908, %v1910
        %v1912 = vadd.f32 %v1911, 0.0036580483
        %v1913 = vmul.f32 %v1908, %v1912
        %v1914 = vadd.f32 %v1913, 0.05243302
        %v1915 = vmul.f32 %v1908, %v1914
        %v1916 = vadd.f32 %v1915, 0.18741608
        %v1917 = vmul.f32 %v1908, %v1916
        %v1918 = vadd.f32 %v1917, 1.1283791
        %v1919 = vmul.f32 %v1345, %v1918
        %v1920 = vmul.f32 %v1908, 3.8918573e-05
        %v1921 = vadd.f32 %v1920, 0.001143296
        %v1922 = vmul.f32 %v1908, %v1921
        %v1923 = vadd.f32 %v1922, 0.014752088
        %v1924 = vmul.f32 %v1908, %v1923
        %v1925 = vadd.f32 %v1924, 0.112945676
        %v1926 = vmul.f32 %v1908, %v1925
        %v1927 = vadd.f32 %v1926, 0.4994258
        %v1928 = vmul.f32 %v1908, %v1927
        %v1929 = vadd.f32 %v1928, 1.0
        %v1930 = vrcp.pop %v1929
        %v1931 = vmul.f32 %v1929, %v1930
        %v1932 = vsub.f32 1.0, %v1931
        %v1933 = vmul.f32 %v1930, %v1932
        %v1934 = vadd.f32 %v1930, %v1933
        %vm1935 = vweird.f32 %v1929
        %vm1936 = vweird.f32 %v1930
        %vm1937 = vmor %vm1935, %vm1936
        %v1938 = vsel %vm1937, %v1930, %v1934
        %v1939 = vand.u32 2147483647, %v1929
        %vm1940 = vcmp.eq.f32.partialorder %v1939, 8.507059e+37
        %v1941 = vand.u32 %v1929, 2147483648
        %v1942 = vor.u32 1.1754944e-38, %v1941
        %v1943 = vsel %vm1940, %v1942, %v1938
        %v1944 = vmul.f32 %v1919, %v1943
        %v1945 = vmin.f32 %v1944, 1.0
        %v1946 = vmax.f32 %v1945, -1.0
        %v1947 = vmul.f32 %v1346, %v1346
        %v1948 = vmin.f32 16.0, %v1947
        %v1949 = vmul.f32 %v1948, 2.1237322e-06
        %v1950 = vadd.f32 %v1949, 0.00028619796
        %v1951 = vmul.f32 %v1948, %v1950
        %v1952 = vadd.f32 %v1951, 0.0036580483
        %v1953 = vmul.f32 %v1948, %v1952
        %v1954 = vadd.f32 %v1953, 0.05243302
        %v1955 = vmul.f32 %v1948, %v1954
        %v1956 = vadd.f32 %v1955, 0.18741608
        %v1957 = vmul.f32 %v1948, %v1956
        %v1958 = vadd.f32 %v1957, 1.1283791
        %v1959 = vmul.f32 %v1346, %v1958
        %v1960 = vmul.f32 %v1948, 3.8918573e-05
        %v1961 = vadd.f32 %v1960, 0.001143296
        %v1962 = vmul.f32 %v1948, %v1961
        %v1963 = vadd.f32 %v1962, 0.014752088
        %v1964 = vmul.f32 %v1948, %v1963
        %v1965 = vadd.f32 %v1964, 0.112945676
        %v1966 = vmul.f32 %v1948, %v1965
        %v1967 = vadd.f32 %v1966, 0.4994258
        %v1968 = vmul.f32 %v1948, %v1967
        %v1969 = vadd.f32 %v1968, 1.0
        %v1970 = vrcp.pop %v1969
        %v1971 = vmul.f32 %v1969, %v1970
        %v1972 = vsub.f32 1.0, %v1971
        %v1973 = vmul.f32 %v1970, %v1972
        %v1974 = vadd.f32 %v1970, %v1973
        %vm1975 = vweird.f32 %v1969
        %vm1976 = vweird.f32 %v1970
        %vm1977 = vmor %vm1975, %vm1976
        %v1978 = vsel %vm1977, %v1970, %v1974
        %v1979 = vand.u32 2147483647, %v1969
        %vm1980 = vcmp.eq.f32.partialorder %v1979, 8.507059e+37
        %v1981 = vand.u32 %v1969, 2147483648
        %v1982 = vor.u32 1.1754944e-38, %v1981
        %v1983 = vsel %vm1980, %v1982, %v1978
        %v1984 = vmul.f32 %v1959, %v1983
        %v1985 = vmin.f32 %v1984, 1.0
        %v1986 = vmax.f32 %v1985, -1.0
        %v1987 = vadd.f32 %v1386, 1.0
        %v1988 = vadd.f32 %v1426, 1.0
        %v1989 = vadd.f32 %v1466, 1.0
        %v1990 = vadd.f32 %v1506, 1.0
        %v1991 = vadd.f32 %v1546, 1.0
        %v1992 = vadd.f32 %v1586, 1.0
        %v1993 = vadd.f32 %v1626, 1.0
        %v1994 = vadd.f32 %v1666, 1.0
        %v1995 = vadd.f32 %v1706, 1.0
        %v1996 = vadd.f32 %v1746, 1.0
        %v1997 = vadd.f32 %v1786, 1.0
        %v1998 = vadd.f32 %v1826, 1.0
        %v1999 = vadd.f32 %v1866, 1.0
        %v2000 = vadd.f32 %v1906, 1.0
        %v2001 = vadd.f32 %v1946, 1.0
        %v2002 = vadd.f32 %v1986, 1.0
        %v2003 = vmul.f32 %v1315, %v1987
        %v2004 = vmul.f32 %v1316, %v1988
        %v2005 = vmul.f32 %v1317, %v1989
        %v2006 = vmul.f32 %v1318, %v1990
        %v2007 = vmul.f32 %v1319, %v1991
        %v2008 = vmul.f32 %v1320, %v1992
        %v2009 = vmul.f32 %v1321, %v1993
        %v2010 = vmul.f32 %v1322, %v1994
        %v2011 = vmul.f32 %v1323, %v1995
        %v2012 = vmul.f32 %v1324, %v1996
        %v2013 = vmul.f32 %v1325, %v1997
        %v2014 = vmul.f32 %v1326, %v1998
        %v2015 = vmul.f32 %v1327, %v1999
        %v2016 = vmul.f32 %v1328, %v2000
        %v2017 = vmul.f32 %v1329, %v2001
        %v2018 = vmul.f32 %v1330, %v2002
        %v2019 = vld [vmem:[%s7] sm:$0x1]
        %v2021 = vperm.slane %v2019, 0
        %v2023 = vmul.f32 %v2003, %v2021
        %v2024 = vmul.f32 %v2004, %v2021
        %v2025 = vmul.f32 %v2005, %v2021
        %v2026 = vmul.f32 %v2006, %v2021
        %v2027 = vmul.f32 %v2007, %v2021
        %v2028 = vmul.f32 %v2008, %v2021
        %v2029 = vmul.f32 %v2009, %v2021
        %v2030 = vmul.f32 %v2010, %v2021
        %v2031 = vmul.f32 %v2011, %v2021
        %v2032 = vmul.f32 %v2012, %v2021
        %v2033 = vmul.f32 %v2013, %v2021
        %v2034 = vmul.f32 %v2014, %v2021
        %v2035 = vmul.f32 %v2015, %v2021
        %v2036 = vmul.f32 %v2016, %v2021
        %v2037 = vmul.f32 %v2017, %v2021
        %v2038 = vmul.f32 %v2018, %v2021
        %2039 = vadd.xlane.f32.xlu0 %v2023
        %v2040 = vpop.xlane.xlu0 %2039
        %2041 = vadd.xlane.f32.xlu0 %v2024
        %v2042 = vpop.xlane.xlu0 %2041
        %2043 = vadd.xlane.f32.xlu0 %v2025
        %v2044 = vpop.xlane.xlu0 %2043
        %2045 = vadd.xlane.f32.xlu0 %v2026
        %v2046 = vpop.xlane.xlu0 %2045
        %2047 = vadd.xlane.f32.xlu0 %v2027
        %v2048 = vpop.xlane.xlu0 %2047
        %2049 = vadd.xlane.f32.xlu0 %v2028
        %v2050 = vpop.xlane.xlu0 %2049
        %2051 = vadd.xlane.f32.xlu0 %v2029
        %v2052 = vpop.xlane.xlu0 %2051
        %2053 = vadd.xlane.f32.xlu0 %v2030
        %v2054 = vpop.xlane.xlu0 %2053
        %2055 = vadd.xlane.f32.xlu0 %v2031
        %v2056 = vpop.xlane.xlu0 %2055
        %2057 = vadd.xlane.f32.xlu0 %v2032
        %v2058 = vpop.xlane.xlu0 %2057
        %2059 = vadd.xlane.f32.xlu0 %v2033
        %v2060 = vpop.xlane.xlu0 %2059
        %2061 = vadd.xlane.f32.xlu0 %v2034
        %v2062 = vpop.xlane.xlu0 %2061
        %2063 = vadd.xlane.f32.xlu0 %v2035
        %v2064 = vpop.xlane.xlu0 %2063
        %2065 = vadd.xlane.f32.xlu0 %v2036
        %v2066 = vpop.xlane.xlu0 %2065
        %2067 = vadd.xlane.f32.xlu0 %v2037
        %v2068 = vpop.xlane.xlu0 %2067
        %2069 = vadd.xlane.f32.xlu0 %v2038
        %v2070 = vpop.xlane.xlu0 %2069
        %v2071 = vld [vmem:[#allocation2] sm:$0x1]
        %v2073 = vperm.slane %v2071, 0
        %2074 = vset.pattern.permute.xlu0 0
        %2075 = vperm.xlu0 %2074, %v2073
        %v2076 = vpop.permute.xlu0 %2075
        %v2078 = vadd.f32 %v2040, %v2076
        %v2079 = vadd.f32 %v2042, %v2076
        %v2080 = vadd.f32 %v2044, %v2076
        %v2081 = vadd.f32 %v2046, %v2076
        %v2082 = vadd.f32 %v2048, %v2076
        %v2083 = vadd.f32 %v2050, %v2076
        %v2084 = vadd.f32 %v2052, %v2076
        %v2085 = vadd.f32 %v2054, %v2076
        %v2086 = vadd.f32 %v2056, %v2076
        %v2087 = vadd.f32 %v2058, %v2076
        %v2088 = vadd.f32 %v2060, %v2076
        %v2089 = vadd.f32 %v2062, %v2076
        %v2090 = vadd.f32 %v2064, %v2076
        %v2091 = vadd.f32 %v2066, %v2076
        %v2092 = vadd.f32 %v2068, %v2076
        %v2093 = vadd.f32 %v2070, %v2076
        %v2110 = vlaneseq
        %v2111 = vand.u32 %v2110, 127
        %v2112 = vperm.slane %v2078, %v2111
        %v2113 = vadd.s32 %v2111, 4294967288
        %v2114 = vperm.slane %v2079, %v2113
        %vm2115 = vcmask 130112
        %v2116 = vsel %vm2115, %v2114, %v2112
        %v2117 = vperm.slane %v2080, %v2111
        %v2118 = vperm.slane %v2081, %v2113
        %v2119 = vsel %vm2115, %v2118, %v2117
        %v2120 = vperm.slane %v2082, %v2111
        %v2121 = vperm.slane %v2083, %v2113
        %v2122 = vsel %vm2115, %v2121, %v2120
        %v2123 = vperm.slane %v2084, %v2111
        %v2124 = vperm.slane %v2085, %v2113
        %v2125 = vsel %vm2115, %v2124, %v2123
        %v2126 = vperm.slane %v2086, %v2111
        %v2127 = vperm.slane %v2087, %v2113
        %v2128 = vsel %vm2115, %v2127, %v2126
        %v2129 = vperm.slane %v2088, %v2111
        %v2130 = vperm.slane %v2089, %v2113
        %v2131 = vsel %vm2115, %v2130, %v2129
        %v2132 = vperm.slane %v2090, %v2111
        %v2133 = vperm.slane %v2091, %v2113
        %v2134 = vsel %vm2115, %v2133, %v2132
        %v2135 = vperm.slane %v2092, %v2111
        %v2136 = vperm.slane %v2093, %v2113
        %v2137 = vsel %vm2115, %v2136, %v2135
        %vm2138 = vcmask 1041409
        %v2139 = vsel %vm2138, %v2119, %v2116
        %vm2140 = vcmask 1042434
        %v2141 = vsel %vm2140, %v2122, %v2139
        %vm2142 = vcmask 1043459
        %v2143 = vsel %vm2142, %v2125, %v2141
        %vm2144 = vcmask 1044484
        %v2145 = vsel %vm2144, %v2128, %v2143
        %vm2146 = vcmask 1045509
        %v2147 = vsel %vm2146, %v2131, %v2145
        %vm2148 = vcmask 1046534
        %v2149 = vsel %vm2148, %v2134, %v2147
        %vm2150 = vcmask 1047559
        %v2151 = vsel %vm2150, %v2137, %v2149
        %vm2153 = vcmask 130048
        %2154 = vst.msk [vmem:[%s417] sm:$0xff] %vm2153, %v2151
        %s2155 = sand.u32 %s232, 1
        %s2156 = scalar_lea.sflag [#allocation5], %s2155
        %s2157 = sand.u32 %s232, 1
        %s2158 = smul.addr %s2157, 8
        %s2159 = scalar_lea.vmem [#allocation12], %s2158
        // Predicated region
        $region77: #{tpu_custom_call.1} parent=55 // pred_check
          %p2160 = pneg %p242
        $region78: #{tpu_custom_call.1} parent=55 // pred_check_branch
          %2162 = sbr.rel (%p2160) target = $region80
        $region79: #{tpu_custom_call.1} parent=55 // pred_region
          %2164 = vsyncadd %s2156, 0
          %s2165 = smul.addr %s30, 8
          %s2166 = scalar_lea.hbm %s9, %s2165
          %s2168 = sshll.u32 %s2159, 4
          %s2169 = int_to_ptr.vmem [resolvable:$true] %s2168
          %s2170 = sshll.u32 %s2166, 4
          %s2171 = int_to_ptr.hbm [resolvable:$true] %s2170
          %2173 = dma.vmem_to_hbm [thread:$0]  %s2169, 128, %s2171, %s2156
        $region80: #{tpu_custom_call.1} parent=55 // pred_fallthru
          _
      $region56: #{tpu_custom_call.1} parent=5 // pred_fallthru
        _
      %p2174 = scmp.le.s32.totalorder 2, %s25
      // Predicated region
      $region81: #{tpu_custom_call.1} parent=5 // pred_check
        %p2175 = pneg %p2174
      $region82: #{tpu_custom_call.1} parent=5 // pred_check_branch
        %2177 = sbr.rel (%p2175) target = $region84
      $region83: #{tpu_custom_call.1} parent=5 // pred_region
        %s2178 = ssub.s32 %s25, 2
        // Predicated region
        $region85: #{tpu_custom_call.1} parent=83 // pred_check
          %p2179 = pneg %p248
        $region86: #{tpu_custom_call.1} parent=83 // pred_check_branch
          %2181 = sbr.rel (%p2179) target = $region88
        $region87: #{tpu_custom_call.1} parent=83 // pred_region
          %s2182 = sand.u32 %s233, 1
          %s2183 = scalar_lea.sflag [#allocation5], %s2182
          %s2184 = sand.u32 %s233, 1
          %s2185 = smul.addr %s2184, 8
          %s2186 = scalar_lea.vmem [#allocation12], %s2185
          %2188 = dma.done %s2183, 128
        $region88: #{tpu_custom_call.1} parent=83 // pred_fallthru
          _
      $region84: #{tpu_custom_call.1} parent=5 // pred_fallthru
        _
    $region6: #{tpu_custom_call.1} parent=1 // loop_footer
      %s29 = sadd.s32 1, %s25
    $region7: #{tpu_custom_call.1} parent=1 // loop_footer_branch
      %24 = sbr.rel target = $region3
    $region8: #{tpu_custom_call.1} parent=1 // loop_exit
      _
    %2189 = vsyncpa [#allocation4], 1
    %s2190 = scalar_lea.sflag [#allocation4], 1
    %2191 = vsyncpa %s2190, 1
    %2192 = vsyncpa [#allocation7], 1
    %2193 = vsyncpa [#allocation10], 1
    %2194 = vsyncpa [#allocation5], 1
    %s2195 = scalar_lea.sflag [#allocation5], 1
    %2196 = vsyncpa %s2195, 1

</llo_original>
